<compile_context>
chip_gen: v6e
topology: v6e:2x2x1
jax: 0.10.0
libtpu: 0.0.40
codegen_flags: <defaults>
</compile_context>

<pallas_src>
import math

import jax
import jax.numpy as jnp
from jax import lax
from jax.experimental import pallas as pl
from jax.experimental.pallas import tpu as pltpu


def multihead_attention(q, k, v, wq, wk, wv, wu, bias,
                        *, compute_dtype=jnp.bfloat16):
    """Fused multi-head attention (eval mode, no mask).

    Args:
      q, k, v : (B, S, D) float32
      wq, wk  : (H, d_k, D) per-head PyTorch Linear weights (out, in), no bias
      wv      : (H, d_v, D)
      wu      : (D, H*d_v)  unify Linear weight (PyTorch layout (out, in))
      bias    : (D,)        unify Linear bias
    Returns:
      (B, S, D) float32
    """
    B, S, D = q.shape
    H, d_k, _ = wq.shape
    d_v = wv.shape[1]
    N = B * S
    scale = 1.0 / math.sqrt(d_k)

    # --- wrapper-side prep (trace time, fused by XLA) ------------------------
    # Head-leading, pre-transposed weights: kernel indexes the leading axis
    # (free ref view) and does x @ W with no in-kernel transpose / lane slice.
    wq_h = jnp.transpose(wq * scale, (0, 2, 1)).astype(compute_dtype)   # (H, D, d_k)
    wk_h = jnp.transpose(wk, (0, 2, 1)).astype(compute_dtype)           # (H, D, d_k)
    wv_h = jnp.transpose(wv, (0, 2, 1)).astype(compute_dtype)           # (H, D, d_v)
    wu_h = jnp.reshape(wu.T, (H, d_v, D)).astype(compute_dtype)         # (H, d_v, D)
    bias2d = jnp.reshape(bias, (1, D)).astype(jnp.float32)              # (1, D)

    # Batch rows fused into the projection matmuls.
    qx = jnp.reshape(q, (N, D)).astype(compute_dtype)
    kx = jnp.reshape(k, (N, D)).astype(compute_dtype)
    vx = jnp.reshape(v, (N, D)).astype(compute_dtype)

    # --- kernel ---------------------------------------------------------------
    def kernel(q_ref, k_ref, v_ref, wq_ref, wk_ref, wv_ref, wu_ref, b_ref, o_ref):
        qf = q_ref[...]                      # (N, D) bf16
        kf = k_ref[...]
        vf = v_ref[...]
        bias_v = b_ref[...]                  # (1, D) f32

        # Batch-fused per-head projections: bf16 x bf16 -> f32 accumulate.
        # Heads live on an unrolled "leading axis" (separate values), so no
        # 8-lane slices of a 128-lane vreg are ever taken.
        qp, kp, vp = [], [], []
        for h in range(H):                   # H small, fully unrolled
            qp.append(jnp.dot(qf, wq_ref[h], preferred_element_type=jnp.float32))
            kp.append(jnp.dot(kf, wk_ref[h], preferred_element_type=jnp.float32))
            vp.append(jnp.dot(vf, wv_ref[h], preferred_element_type=jnp.float32))

        for b in range(B):                   # unrolled, B small
            r0 = b * S                       # static, sublane-tile aligned (S=8)
            acc = jnp.zeros((S, D), jnp.float32)
            for h in range(H):
                # whole-vreg row selects of the f32 projections, then bf16 cast
                qh = qp[h][r0:r0 + S, :].astype(jnp.bfloat16)    # (S, d_k)
                kh = kp[h][r0:r0 + S, :].astype(jnp.bfloat16)    # (S, d_k)
                vh = vp[h][r0:r0 + S, :].astype(jnp.bfloat16)    # (S, d_v)

                # scores = qh . kh^T (contract last dims; no transpose op)
                s = lax.dot_general(qh, kh, (((1,), (1,)), ((), ())),
                                    preferred_element_type=jnp.float32)  # (S, S)
                s = s - jnp.max(s, axis=-1, keepdims=True)
                p = jnp.exp(s)                                   # f32 softmax path

                # P.V first (bf16 operands), normalize afterwards on (S, d_v)
                un = jnp.dot(p.astype(jnp.bfloat16), vh,
                             preferred_element_type=jnp.float32)          # (S, d_v)
                head = un * pl.reciprocal(jnp.sum(p, axis=-1, keepdims=True),
                                          approx=True)

                # this head's slice of (concat @ Wu^T), accumulated in f32
                acc = acc + jnp.dot(head.astype(jnp.bfloat16), wu_ref[h],
                                    preferred_element_type=jnp.float32)   # (S, D)

            o_ref[r0:r0 + S, :] = acc + bias_v   # bias broadcast (1, D)

    vmem = pltpu.MemorySpace.VMEM
    out = pl.pallas_call(
        kernel,
        out_shape=jax.ShapeDtypeStruct((N, D), jnp.float32),
        in_specs=[pl.BlockSpec(memory_space=vmem)] * 8,
        out_specs=pl.BlockSpec(memory_space=vmem),
    )(qx, kx, vx, wq_h, wk_h, wv_h, wu_h, bias2d)

    return jnp.reshape(out, (B, S, D))


def reference_mha(q, k, v, wq, wk, wv, wu, bias):
    """Plain-JAX f32 reference mirroring the PyTorch forward (eval mode)."""
    H, d_k, D = wq.shape
    heads = []
    for h in range(H):
        qh = q @ wq[h].T
        kh = k @ wk[h].T
        vh = v @ wv[h].T
        s = (qh @ jnp.swapaxes(kh, -1, -2)) / math.sqrt(d_k)
        a = jax.nn.softmax(s, axis=-1)
        heads.append(a @ vh)
    concat = jnp.concatenate(heads, axis=-1)        # (B, S, H*d_v)
    return concat @ wu.T + bias                     # unify Linear


if __name__ == "__main__":
    n_heads = 4
    d_model = 32
    d_k = d_model // n_heads
    d_v = d_model // n_heads
    B, S = 2, 8

    key = jax.random.PRNGKey(0)
    ks = jax.random.split(key, 9)

    # deterministic synthetic parameters (PyTorch Linear weight shape = (out, in))
    wq = jax.random.normal(ks[0], (n_heads, d_k, d_model), jnp.float32) * 0.1
    wk = jax.random.normal(ks[1], (n_heads, d_k, d_model), jnp.float32) * 0.1
    wv = jax.random.normal(ks[2], (n_heads, d_v, d_model), jnp.float32) * 0.1
    wu = jax.random.normal(ks[3], (d_model, n_heads * d_v), jnp.float32) * 0.1
    bias = jax.random.normal(ks[4], (d_model,), jnp.float32) * 0.1

    q = jax.random.normal(ks[5], (B, S, d_model), jnp.float32)
    k = jax.random.normal(ks[6], (B, S, d_model), jnp.float32)
    v = jax.random.normal(ks[7], (B, S, d_model), jnp.float32)

    out = multihead_attention(q, k, v, wq, wk, wv, wu, bias)
    out = jax.block_until_ready(out)

    ref = reference_mha(q, k, v, wq, wk, wv, wu, bias)
    assert out.shape == (B, S, d_model)
    # bf16 matmul operands (f32 accumulation) + approx reciprocal -> compare
    # against the f32 reference at a correspondingly loosened tolerance.
    assert jnp.allclose(out, ref, atol=3e-2, rtol=3e-2), "mismatch vs reference"

    print("KERNEL_OK")
</pallas_src>

<mosaic_0001>
module attributes {stable_mosaic.version = 11 : i64} {
  func.func @kernel(%arg0: memref<16x32xbf16, #tpu.memory_space<vmem>>, %arg1: memref<16x32xbf16, #tpu.memory_space<vmem>>, %arg2: memref<16x32xbf16, #tpu.memory_space<vmem>>, %arg3: memref<4x32x8xbf16, #tpu.memory_space<vmem>>, %arg4: memref<4x32x8xbf16, #tpu.memory_space<vmem>>, %arg5: memref<4x32x8xbf16, #tpu.memory_space<vmem>>, %arg6: memref<4x8x32xbf16, #tpu.memory_space<vmem>>, %arg7: memref<1x32xf32, #tpu.memory_space<vmem>>, %arg8: memref<16x32xf32, #tpu.memory_space<vmem>>) attributes {dimension_semantics = [], scalar_prefetch = 0 : i64, scratch_operands = 0 : i64, tpu.core_type = #tpu.core_type<tc>} {
    %c0 = arith.constant 0 : index
    %c0_0 = arith.constant 0 : index
    %0 = vector.load %arg0[%c0, %c0_0] : memref<16x32xbf16, #tpu.memory_space<vmem>>, vector<16x32xbf16>
    %c0_1 = arith.constant 0 : index
    %c0_2 = arith.constant 0 : index
    %1 = vector.load %arg1[%c0_1, %c0_2] : memref<16x32xbf16, #tpu.memory_space<vmem>>, vector<16x32xbf16>
    %c0_3 = arith.constant 0 : index
    %c0_4 = arith.constant 0 : index
    %2 = vector.load %arg2[%c0_3, %c0_4] : memref<16x32xbf16, #tpu.memory_space<vmem>>, vector<16x32xbf16>
    %c0_5 = arith.constant 0 : index
    %c0_6 = arith.constant 0 : index
    %3 = vector.load %arg7[%c0_5, %c0_6] : memref<1x32xf32, #tpu.memory_space<vmem>>, vector<1x32xf32>
    %c0_7 = arith.constant 0 : index
    %c0_8 = arith.constant 0 : index
    %c0_9 = arith.constant 0 : index
    %4 = vector.load %arg3[%c0_7, %c0_8, %c0_9] : memref<4x32x8xbf16, #tpu.memory_space<vmem>>, vector<1x32x8xbf16>
    %5 = vector.shape_cast %4 : vector<1x32x8xbf16> to vector<32x8xbf16>
    %cst = arith.constant dense<0.000000e+00> : vector<16x8xf32>
    %6 = tpu.matmul %0, %5, %cst {dimension_numbers = #tpu.dot_dimension_numbers<[1], [0], [0], [1], [0, 0, 1, 1], [], []>} : vector<16x32xbf16>, vector<32x8xbf16>, vector<16x8xf32> -> vector<16x8xf32>
    %c0_10 = arith.constant 0 : index
    %c0_11 = arith.constant 0 : index
    %c0_12 = arith.constant 0 : index
    %7 = vector.load %arg4[%c0_10, %c0_11, %c0_12] : memref<4x32x8xbf16, #tpu.memory_space<vmem>>, vector<1x32x8xbf16>
    %8 = vector.shape_cast %7 : vector<1x32x8xbf16> to vector<32x8xbf16>
    %cst_13 = arith.constant dense<0.000000e+00> : vector<16x8xf32>
    %9 = tpu.matmul %1, %8, %cst_13 {dimension_numbers = #tpu.dot_dimension_numbers<[1], [0], [0], [1], [0, 0, 1, 1], [], []>} : vector<16x32xbf16>, vector<32x8xbf16>, vector<16x8xf32> -> vector<16x8xf32>
    %c0_14 = arith.constant 0 : index
    %c0_15 = arith.constant 0 : index
    %c0_16 = arith.constant 0 : index
    %10 = vector.load %arg5[%c0_14, %c0_15, %c0_16] : memref<4x32x8xbf16, #tpu.memory_space<vmem>>, vector<1x32x8xbf16>
    %11 = vector.shape_cast %10 : vector<1x32x8xbf16> to vector<32x8xbf16>
    %cst_17 = arith.constant dense<0.000000e+00> : vector<16x8xf32>
    %12 = tpu.matmul %2, %11, %cst_17 {dimension_numbers = #tpu.dot_dimension_numbers<[1], [0], [0], [1], [0, 0, 1, 1], [], []>} : vector<16x32xbf16>, vector<32x8xbf16>, vector<16x8xf32> -> vector<16x8xf32>
    %c1 = arith.constant 1 : index
    %c0_18 = arith.constant 0 : index
    %c0_19 = arith.constant 0 : index
    %13 = vector.load %arg3[%c1, %c0_18, %c0_19] : memref<4x32x8xbf16, #tpu.memory_space<vmem>>, vector<1x32x8xbf16>
    %14 = vector.shape_cast %13 : vector<1x32x8xbf16> to vector<32x8xbf16>
    %cst_20 = arith.constant dense<0.000000e+00> : vector<16x8xf32>
    %15 = tpu.matmul %0, %14, %cst_20 {dimension_numbers = #tpu.dot_dimension_numbers<[1], [0], [0], [1], [0, 0, 1, 1], [], []>} : vector<16x32xbf16>, vector<32x8xbf16>, vector<16x8xf32> -> vector<16x8xf32>
    %c1_21 = arith.constant 1 : index
    %c0_22 = arith.constant 0 : index
    %c0_23 = arith.constant 0 : index
    %16 = vector.load %arg4[%c1_21, %c0_22, %c0_23] : memref<4x32x8xbf16, #tpu.memory_space<vmem>>, vector<1x32x8xbf16>
    %17 = vector.shape_cast %16 : vector<1x32x8xbf16> to vector<32x8xbf16>
    %cst_24 = arith.constant dense<0.000000e+00> : vector<16x8xf32>
    %18 = tpu.matmul %1, %17, %cst_24 {dimension_numbers = #tpu.dot_dimension_numbers<[1], [0], [0], [1], [0, 0, 1, 1], [], []>} : vector<16x32xbf16>, vector<32x8xbf16>, vector<16x8xf32> -> vector<16x8xf32>
    %c1_25 = arith.constant 1 : index
    %c0_26 = arith.constant 0 : index
    %c0_27 = arith.constant 0 : index
    %19 = vector.load %arg5[%c1_25, %c0_26, %c0_27] : memref<4x32x8xbf16, #tpu.memory_space<vmem>>, vector<1x32x8xbf16>
    %20 = vector.shape_cast %19 : vector<1x32x8xbf16> to vector<32x8xbf16>
    %cst_28 = arith.constant dense<0.000000e+00> : vector<16x8xf32>
    %21 = tpu.matmul %2, %20, %cst_28 {dimension_numbers = #tpu.dot_dimension_numbers<[1], [0], [0], [1], [0, 0, 1, 1], [], []>} : vector<16x32xbf16>, vector<32x8xbf16>, vector<16x8xf32> -> vector<16x8xf32>
    %c2 = arith.constant 2 : index
    %c0_29 = arith.constant 0 : index
    %c0_30 = arith.constant 0 : index
    %22 = vector.load %arg3[%c2, %c0_29, %c0_30] : memref<4x32x8xbf16, #tpu.memory_space<vmem>>, vector<1x32x8xbf16>
    %23 = vector.shape_cast %22 : vector<1x32x8xbf16> to vector<32x8xbf16>
    %cst_31 = arith.constant dense<0.000000e+00> : vector<16x8xf32>
    %24 = tpu.matmul %0, %23, %cst_31 {dimension_numbers = #tpu.dot_dimension_numbers<[1], [0], [0], [1], [0, 0, 1, 1], [], []>} : vector<16x32xbf16>, vector<32x8xbf16>, vector<16x8xf32> -> vector<16x8xf32>
    %c2_32 = arith.constant 2 : index
    %c0_33 = arith.constant 0 : index
    %c0_34 = arith.constant 0 : index
    %25 = vector.load %arg4[%c2_32, %c0_33, %c0_34] : memref<4x32x8xbf16, #tpu.memory_space<vmem>>, vector<1x32x8xbf16>
    %26 = vector.shape_cast %25 : vector<1x32x8xbf16> to vector<32x8xbf16>
    %cst_35 = arith.constant dense<0.000000e+00> : vector<16x8xf32>
    %27 = tpu.matmul %1, %26, %cst_35 {dimension_numbers = #tpu.dot_dimension_numbers<[1], [0], [0], [1], [0, 0, 1, 1], [], []>} : vector<16x32xbf16>, vector<32x8xbf16>, vector<16x8xf32> -> vector<16x8xf32>
    %c2_36 = arith.constant 2 : index
    %c0_37 = arith.constant 0 : index
    %c0_38 = arith.constant 0 : index
    %28 = vector.load %arg5[%c2_36, %c0_37, %c0_38] : memref<4x32x8xbf16, #tpu.memory_space<vmem>>, vector<1x32x8xbf16>
    %29 = vector.shape_cast %28 : vector<1x32x8xbf16> to vector<32x8xbf16>
    %cst_39 = arith.constant dense<0.000000e+00> : vector<16x8xf32>
    %30 = tpu.matmul %2, %29, %cst_39 {dimension_numbers = #tpu.dot_dimension_numbers<[1], [0], [0], [1], [0, 0, 1, 1], [], []>} : vector<16x32xbf16>, vector<32x8xbf16>, vector<16x8xf32> -> vector<16x8xf32>
    %c3 = arith.constant 3 : index
    %c0_40 = arith.constant 0 : index
    %c0_41 = arith.constant 0 : index
    %31 = vector.load %arg3[%c3, %c0_40, %c0_41] : memref<4x32x8xbf16, #tpu.memory_space<vmem>>, vector<1x32x8xbf16>
    %32 = vector.shape_cast %31 : vector<1x32x8xbf16> to vector<32x8xbf16>
    %cst_42 = arith.constant dense<0.000000e+00> : vector<16x8xf32>
    %33 = tpu.matmul %0, %32, %cst_42 {dimension_numbers = #tpu.dot_dimension_numbers<[1], [0], [0], [1], [0, 0, 1, 1], [], []>} : vector<16x32xbf16>, vector<32x8xbf16>, vector<16x8xf32> -> vector<16x8xf32>
    %c3_43 = arith.constant 3 : index
    %c0_44 = arith.constant 0 : index
    %c0_45 = arith.constant 0 : index
    %34 = vector.load %arg4[%c3_43, %c0_44, %c0_45] : memref<4x32x8xbf16, #tpu.memory_space<vmem>>, vector<1x32x8xbf16>
    %35 = vector.shape_cast %34 : vector<1x32x8xbf16> to vector<32x8xbf16>
    %cst_46 = arith.constant dense<0.000000e+00> : vector<16x8xf32>
    %36 = tpu.matmul %1, %35, %cst_46 {dimension_numbers = #tpu.dot_dimension_numbers<[1], [0], [0], [1], [0, 0, 1, 1], [], []>} : vector<16x32xbf16>, vector<32x8xbf16>, vector<16x8xf32> -> vector<16x8xf32>
    %c3_47 = arith.constant 3 : index
    %c0_48 = arith.constant 0 : index
    %c0_49 = arith.constant 0 : index
    %37 = vector.load %arg5[%c3_47, %c0_48, %c0_49] : memref<4x32x8xbf16, #tpu.memory_space<vmem>>, vector<1x32x8xbf16>
    %38 = vector.shape_cast %37 : vector<1x32x8xbf16> to vector<32x8xbf16>
    %cst_50 = arith.constant dense<0.000000e+00> : vector<16x8xf32>
    %39 = tpu.matmul %2, %38, %cst_50 {dimension_numbers = #tpu.dot_dimension_numbers<[1], [0], [0], [1], [0, 0, 1, 1], [], []>} : vector<16x32xbf16>, vector<32x8xbf16>, vector<16x8xf32> -> vector<16x8xf32>
    %cst_51 = arith.constant 0.000000e+00 : f32
    %40 = vector.broadcast %cst_51 : f32 to vector<8x32xf32>
    %41 = vector.extract_strided_slice %6 {offsets = [0, 0], sizes = [8, 8], strides = [1, 1]} : vector<16x8xf32> to vector<8x8xf32>
    %42 = arith.truncf %41 : vector<8x8xf32> to vector<8x8xbf16>
    %43 = vector.extract_strided_slice %9 {offsets = [0, 0], sizes = [8, 8], strides = [1, 1]} : vector<16x8xf32> to vector<8x8xf32>
    %44 = arith.truncf %43 : vector<8x8xf32> to vector<8x8xbf16>
    %45 = vector.extract_strided_slice %12 {offsets = [0, 0], sizes = [8, 8], strides = [1, 1]} : vector<16x8xf32> to vector<8x8xf32>
    %46 = arith.truncf %45 : vector<8x8xf32> to vector<8x8xbf16>
    %cst_52 = arith.constant dense<0.000000e+00> : vector<8x8xf32>
    %47 = tpu.matmul %42, %44, %cst_52 {dimension_numbers = #tpu.dot_dimension_numbers<[1], [1], [0], [0], [0, 0, 1, 0], [], []>} : vector<8x8xbf16>, vector<8x8xbf16>, vector<8x8xf32> -> vector<8x8xf32>
    %cst_53 = arith.constant dense<0xFF800000> : vector<8xf32>
    %48 = vector.multi_reduction <maximumf>, %47, %cst_53 [1] : vector<8x8xf32> to vector<8xf32>
    %49 = vector.shape_cast %48 : vector<8xf32> to vector<8x1xf32>
    %50 = vector.broadcast %49 : vector<8x1xf32> to vector<8x8xf32>
    %51 = arith.subf %47, %50 : vector<8x8xf32>
    %52 = math.exp %51 : vector<8x8xf32>
    %53 = arith.truncf %52 : vector<8x8xf32> to vector<8x8xbf16>
    %cst_54 = arith.constant dense<0.000000e+00> : vector<8x8xf32>
    %54 = tpu.matmul %53, %46, %cst_54 {dimension_numbers = #tpu.dot_dimension_numbers<[1], [0], [0], [1], [0, 0, 1, 1], [], []>} : vector<8x8xbf16>, vector<8x8xbf16>, vector<8x8xf32> -> vector<8x8xf32>
    %cst_55 = arith.constant dense<0.000000e+00> : vector<8xf32>
    %55 = vector.multi_reduction <add>, %52, %cst_55 [1] : vector<8x8xf32> to vector<8xf32>
    %56 = vector.shape_cast %55 : vector<8xf32> to vector<8x1xf32>
    %57 = tpu.reciprocal %56 {approx = true} : vector<8x1xf32> -> vector<8x1xf32>
    %58 = vector.broadcast %57 : vector<8x1xf32> to vector<8x8xf32>
    %59 = arith.mulf %54, %58 : vector<8x8xf32>
    %60 = arith.truncf %59 : vector<8x8xf32> to vector<8x8xbf16>
    %c0_56 = arith.constant 0 : index
    %c0_57 = arith.constant 0 : index
    %c0_58 = arith.constant 0 : index
    %61 = vector.load %arg6[%c0_56, %c0_57, %c0_58] : memref<4x8x32xbf16, #tpu.memory_space<vmem>>, vector<1x8x32xbf16>
    %62 = vector.shape_cast %61 : vector<1x8x32xbf16> to vector<8x32xbf16>
    %cst_59 = arith.constant dense<0.000000e+00> : vector<8x32xf32>
    %63 = tpu.matmul %60, %62, %cst_59 {dimension_numbers = #tpu.dot_dimension_numbers<[1], [0], [0], [1], [0, 0, 1, 1], [], []>} : vector<8x8xbf16>, vector<8x32xbf16>, vector<8x32xf32> -> vector<8x32xf32>
    %64 = arith.addf %40, %63 : vector<8x32xf32>
    %65 = vector.extract_strided_slice %15 {offsets = [0, 0], sizes = [8, 8], strides = [1, 1]} : vector<16x8xf32> to vector<8x8xf32>
    %66 = arith.truncf %65 : vector<8x8xf32> to vector<8x8xbf16>
    %67 = vector.extract_strided_slice %18 {offsets = [0, 0], sizes = [8, 8], strides = [1, 1]} : vector<16x8xf32> to vector<8x8xf32>
    %68 = arith.truncf %67 : vector<8x8xf32> to vector<8x8xbf16>
    %69 = vector.extract_strided_slice %21 {offsets = [0, 0], sizes = [8, 8], strides = [1, 1]} : vector<16x8xf32> to vector<8x8xf32>
    %70 = arith.truncf %69 : vector<8x8xf32> to vector<8x8xbf16>
    %cst_60 = arith.constant dense<0.000000e+00> : vector<8x8xf32>
    %71 = tpu.matmul %66, %68, %cst_60 {dimension_numbers = #tpu.dot_dimension_numbers<[1], [1], [0], [0], [0, 0, 1, 0], [], []>} : vector<8x8xbf16>, vector<8x8xbf16>, vector<8x8xf32> -> vector<8x8xf32>
    %cst_61 = arith.constant dense<0xFF800000> : vector<8xf32>
    %72 = vector.multi_reduction <maximumf>, %71, %cst_61 [1] : vector<8x8xf32> to vector<8xf32>
    %73 = vector.shape_cast %72 : vector<8xf32> to vector<8x1xf32>
    %74 = vector.broadcast %73 : vector<8x1xf32> to vector<8x8xf32>
    %75 = arith.subf %71, %74 : vector<8x8xf32>
    %76 = math.exp %75 : vector<8x8xf32>
    %77 = arith.truncf %76 : vector<8x8xf32> to vector<8x8xbf16>
    %cst_62 = arith.constant dense<0.000000e+00> : vector<8x8xf32>
    %78 = tpu.matmul %77, %70, %cst_62 {dimension_numbers = #tpu.dot_dimension_numbers<[1], [0], [0], [1], [0, 0, 1, 1], [], []>} : vector<8x8xbf16>, vector<8x8xbf16>, vector<8x8xf32> -> vector<8x8xf32>
    %cst_63 = arith.constant dense<0.000000e+00> : vector<8xf32>
    %79 = vector.multi_reduction <add>, %76, %cst_63 [1] : vector<8x8xf32> to vector<8xf32>
    %80 = vector.shape_cast %79 : vector<8xf32> to vector<8x1xf32>
    %81 = tpu.reciprocal %80 {approx = true} : vector<8x1xf32> -> vector<8x1xf32>
    %82 = vector.broadcast %81 : vector<8x1xf32> to vector<8x8xf32>
    %83 = arith.mulf %78, %82 : vector<8x8xf32>
    %84 = arith.truncf %83 : vector<8x8xf32> to vector<8x8xbf16>
    %c1_64 = arith.constant 1 : index
    %c0_65 = arith.constant 0 : index
    %c0_66 = arith.constant 0 : index
    %85 = vector.load %arg6[%c1_64, %c0_65, %c0_66] : memref<4x8x32xbf16, #tpu.memory_space<vmem>>, vector<1x8x32xbf16>
    %86 = vector.shape_cast %85 : vector<1x8x32xbf16> to vector<8x32xbf16>
    %cst_67 = arith.constant dense<0.000000e+00> : vector<8x32xf32>
    %87 = tpu.matmul %84, %86, %cst_67 {dimension_numbers = #tpu.dot_dimension_numbers<[1], [0], [0], [1], [0, 0, 1, 1], [], []>} : vector<8x8xbf16>, vector<8x32xbf16>, vector<8x32xf32> -> vector<8x32xf32>
    %88 = arith.addf %64, %87 : vector<8x32xf32>
    %89 = vector.extract_strided_slice %24 {offsets = [0, 0], sizes = [8, 8], strides = [1, 1]} : vector<16x8xf32> to vector<8x8xf32>
    %90 = arith.truncf %89 : vector<8x8xf32> to vector<8x8xbf16>
    %91 = vector.extract_strided_slice %27 {offsets = [0, 0], sizes = [8, 8], strides = [1, 1]} : vector<16x8xf32> to vector<8x8xf32>
    %92 = arith.truncf %91 : vector<8x8xf32> to vector<8x8xbf16>
    %93 = vector.extract_strided_slice %30 {offsets = [0, 0], sizes = [8, 8], strides = [1, 1]} : vector<16x8xf32> to vector<8x8xf32>
    %94 = arith.truncf %93 : vector<8x8xf32> to vector<8x8xbf16>
    %cst_68 = arith.constant dense<0.000000e+00> : vector<8x8xf32>
    %95 = tpu.matmul %90, %92, %cst_68 {dimension_numbers = #tpu.dot_dimension_numbers<[1], [1], [0], [0], [0, 0, 1, 0], [], []>} : vector<8x8xbf16>, vector<8x8xbf16>, vector<8x8xf32> -> vector<8x8xf32>
    %cst_69 = arith.constant dense<0xFF800000> : vector<8xf32>
    %96 = vector.multi_reduction <maximumf>, %95, %cst_69 [1] : vector<8x8xf32> to vector<8xf32>
    %97 = vector.shape_cast %96 : vector<8xf32> to vector<8x1xf32>
    %98 = vector.broadcast %97 : vector<8x1xf32> to vector<8x8xf32>
    %99 = arith.subf %95, %98 : vector<8x8xf32>
    %100 = math.exp %99 : vector<8x8xf32>
    %101 = arith.truncf %100 : vector<8x8xf32> to vector<8x8xbf16>
    %cst_70 = arith.constant dense<0.000000e+00> : vector<8x8xf32>
    %102 = tpu.matmul %101, %94, %cst_70 {dimension_numbers = #tpu.dot_dimension_numbers<[1], [0], [0], [1], [0, 0, 1, 1], [], []>} : vector<8x8xbf16>, vector<8x8xbf16>, vector<8x8xf32> -> vector<8x8xf32>
    %cst_71 = arith.constant dense<0.000000e+00> : vector<8xf32>
    %103 = vector.multi_reduction <add>, %100, %cst_71 [1] : vector<8x8xf32> to vector<8xf32>
    %104 = vector.shape_cast %103 : vector<8xf32> to vector<8x1xf32>
    %105 = tpu.reciprocal %104 {approx = true} : vector<8x1xf32> -> vector<8x1xf32>
    %106 = vector.broadcast %105 : vector<8x1xf32> to vector<8x8xf32>
    %107 = arith.mulf %102, %106 : vector<8x8xf32>
    %108 = arith.truncf %107 : vector<8x8xf32> to vector<8x8xbf16>
    %c2_72 = arith.constant 2 : index
    %c0_73 = arith.constant 0 : index
    %c0_74 = arith.constant 0 : index
    %109 = vector.load %arg6[%c2_72, %c0_73, %c0_74] : memref<4x8x32xbf16, #tpu.memory_space<vmem>>, vector<1x8x32xbf16>
    %110 = vector.shape_cast %109 : vector<1x8x32xbf16> to vector<8x32xbf16>
    %cst_75 = arith.constant dense<0.000000e+00> : vector<8x32xf32>
    %111 = tpu.matmul %108, %110, %cst_75 {dimension_numbers = #tpu.dot_dimension_numbers<[1], [0], [0], [1], [0, 0, 1, 1], [], []>} : vector<8x8xbf16>, vector<8x32xbf16>, vector<8x32xf32> -> vector<8x32xf32>
    %112 = arith.addf %88, %111 : vector<8x32xf32>
    %113 = vector.extract_strided_slice %33 {offsets = [0, 0], sizes = [8, 8], strides = [1, 1]} : vector<16x8xf32> to vector<8x8xf32>
    %114 = arith.truncf %113 : vector<8x8xf32> to vector<8x8xbf16>
    %115 = vector.extract_strided_slice %36 {offsets = [0, 0], sizes = [8, 8], strides = [1, 1]} : vector<16x8xf32> to vector<8x8xf32>
    %116 = arith.truncf %115 : vector<8x8xf32> to vector<8x8xbf16>
    %117 = vector.extract_strided_slice %39 {offsets = [0, 0], sizes = [8, 8], strides = [1, 1]} : vector<16x8xf32> to vector<8x8xf32>
    %118 = arith.truncf %117 : vector<8x8xf32> to vector<8x8xbf16>
    %cst_76 = arith.constant dense<0.000000e+00> : vector<8x8xf32>
    %119 = tpu.matmul %114, %116, %cst_76 {dimension_numbers = #tpu.dot_dimension_numbers<[1], [1], [0], [0], [0, 0, 1, 0], [], []>} : vector<8x8xbf16>, vector<8x8xbf16>, vector<8x8xf32> -> vector<8x8xf32>
    %cst_77 = arith.constant dense<0xFF800000> : vector<8xf32>
    %120 = vector.multi_reduction <maximumf>, %119, %cst_77 [1] : vector<8x8xf32> to vector<8xf32>
    %121 = vector.shape_cast %120 : vector<8xf32> to vector<8x1xf32>
    %122 = vector.broadcast %121 : vector<8x1xf32> to vector<8x8xf32>
    %123 = arith.subf %119, %122 : vector<8x8xf32>
    %124 = math.exp %123 : vector<8x8xf32>
    %125 = arith.truncf %124 : vector<8x8xf32> to vector<8x8xbf16>
    %cst_78 = arith.constant dense<0.000000e+00> : vector<8x8xf32>
    %126 = tpu.matmul %125, %118, %cst_78 {dimension_numbers = #tpu.dot_dimension_numbers<[1], [0], [0], [1], [0, 0, 1, 1], [], []>} : vector<8x8xbf16>, vector<8x8xbf16>, vector<8x8xf32> -> vector<8x8xf32>
    %cst_79 = arith.constant dense<0.000000e+00> : vector<8xf32>
    %127 = vector.multi_reduction <add>, %124, %cst_79 [1] : vector<8x8xf32> to vector<8xf32>
    %128 = vector.shape_cast %127 : vector<8xf32> to vector<8x1xf32>
    %129 = tpu.reciprocal %128 {approx = true} : vector<8x1xf32> -> vector<8x1xf32>
    %130 = vector.broadcast %129 : vector<8x1xf32> to vector<8x8xf32>
    %131 = arith.mulf %126, %130 : vector<8x8xf32>
    %132 = arith.truncf %131 : vector<8x8xf32> to vector<8x8xbf16>
    %c3_80 = arith.constant 3 : index
    %c0_81 = arith.constant 0 : index
    %c0_82 = arith.constant 0 : index
    %133 = vector.load %arg6[%c3_80, %c0_81, %c0_82] : memref<4x8x32xbf16, #tpu.memory_space<vmem>>, vector<1x8x32xbf16>
    %134 = vector.shape_cast %133 : vector<1x8x32xbf16> to vector<8x32xbf16>
    %cst_83 = arith.constant dense<0.000000e+00> : vector<8x32xf32>
    %135 = tpu.matmul %132, %134, %cst_83 {dimension_numbers = #tpu.dot_dimension_numbers<[1], [0], [0], [1], [0, 0, 1, 1], [], []>} : vector<8x8xbf16>, vector<8x32xbf16>, vector<8x32xf32> -> vector<8x32xf32>
    %136 = arith.addf %112, %135 : vector<8x32xf32>
    %137 = vector.broadcast %3 : vector<1x32xf32> to vector<8x32xf32>
    %138 = arith.addf %136, %137 : vector<8x32xf32>
    %c0_84 = arith.constant 0 : index
    %c0_85 = arith.constant 0 : index
    %139 = vector.load %arg8[%c0_84, %c0_85] : memref<16x32xf32, #tpu.memory_space<vmem>>, vector<8x32xf32>
    tpu.vector_store %arg8[%c0_84, %c0_85], %138 {strides = array<i32>} : memref<16x32xf32, #tpu.memory_space<vmem>>, vector<8x32xf32>,
    %cst_86 = arith.constant 0.000000e+00 : f32
    %140 = vector.broadcast %cst_86 : f32 to vector<8x32xf32>
    %141 = vector.extract_strided_slice %6 {offsets = [8, 0], sizes = [8, 8], strides = [1, 1]} : vector<16x8xf32> to vector<8x8xf32>
    %142 = arith.truncf %141 : vector<8x8xf32> to vector<8x8xbf16>
    %143 = vector.extract_strided_slice %9 {offsets = [8, 0], sizes = [8, 8], strides = [1, 1]} : vector<16x8xf32> to vector<8x8xf32>
    %144 = arith.truncf %143 : vector<8x8xf32> to vector<8x8xbf16>
    %145 = vector.extract_strided_slice %12 {offsets = [8, 0], sizes = [8, 8], strides = [1, 1]} : vector<16x8xf32> to vector<8x8xf32>
    %146 = arith.truncf %145 : vector<8x8xf32> to vector<8x8xbf16>
    %cst_87 = arith.constant dense<0.000000e+00> : vector<8x8xf32>
    %147 = tpu.matmul %142, %144, %cst_87 {dimension_numbers = #tpu.dot_dimension_numbers<[1], [1], [0], [0], [0, 0, 1, 0], [], []>} : vector<8x8xbf16>, vector<8x8xbf16>, vector<8x8xf32> -> vector<8x8xf32>
    %cst_88 = arith.constant dense<0xFF800000> : vector<8xf32>
    %148 = vector.multi_reduction <maximumf>, %147, %cst_88 [1] : vector<8x8xf32> to vector<8xf32>
    %149 = vector.shape_cast %148 : vector<8xf32> to vector<8x1xf32>
    %150 = vector.broadcast %149 : vector<8x1xf32> to vector<8x8xf32>
    %151 = arith.subf %147, %150 : vector<8x8xf32>
    %152 = math.exp %151 : vector<8x8xf32>
    %153 = arith.truncf %152 : vector<8x8xf32> to vector<8x8xbf16>
    %cst_89 = arith.constant dense<0.000000e+00> : vector<8x8xf32>
    %154 = tpu.matmul %153, %146, %cst_89 {dimension_numbers = #tpu.dot_dimension_numbers<[1], [0], [0], [1], [0, 0, 1, 1], [], []>} : vector<8x8xbf16>, vector<8x8xbf16>, vector<8x8xf32> -> vector<8x8xf32>
    %cst_90 = arith.constant dense<0.000000e+00> : vector<8xf32>
    %155 = vector.multi_reduction <add>, %152, %cst_90 [1] : vector<8x8xf32> to vector<8xf32>
    %156 = vector.shape_cast %155 : vector<8xf32> to vector<8x1xf32>
    %157 = tpu.reciprocal %156 {approx = true} : vector<8x1xf32> -> vector<8x1xf32>
    %158 = vector.broadcast %157 : vector<8x1xf32> to vector<8x8xf32>
    %159 = arith.mulf %154, %158 : vector<8x8xf32>
    %160 = arith.truncf %159 : vector<8x8xf32> to vector<8x8xbf16>
    %c0_91 = arith.constant 0 : index
    %c0_92 = arith.constant 0 : index
    %c0_93 = arith.constant 0 : index
    %161 = vector.load %arg6[%c0_91, %c0_92, %c0_93] : memref<4x8x32xbf16, #tpu.memory_space<vmem>>, vector<1x8x32xbf16>
    %162 = vector.shape_cast %161 : vector<1x8x32xbf16> to vector<8x32xbf16>
    %cst_94 = arith.constant dense<0.000000e+00> : vector<8x32xf32>
    %163 = tpu.matmul %160, %162, %cst_94 {dimension_numbers = #tpu.dot_dimension_numbers<[1], [0], [0], [1], [0, 0, 1, 1], [], []>} : vector<8x8xbf16>, vector<8x32xbf16>, vector<8x32xf32> -> vector<8x32xf32>
    %164 = arith.addf %140, %163 : vector<8x32xf32>
    %165 = vector.extract_strided_slice %15 {offsets = [8, 0], sizes = [8, 8], strides = [1, 1]} : vector<16x8xf32> to vector<8x8xf32>
    %166 = arith.truncf %165 : vector<8x8xf32> to vector<8x8xbf16>
    %167 = vector.extract_strided_slice %18 {offsets = [8, 0], sizes = [8, 8], strides = [1, 1]} : vector<16x8xf32> to vector<8x8xf32>
    %168 = arith.truncf %167 : vector<8x8xf32> to vector<8x8xbf16>
    %169 = vector.extract_strided_slice %21 {offsets = [8, 0], sizes = [8, 8], strides = [1, 1]} : vector<16x8xf32> to vector<8x8xf32>
    %170 = arith.truncf %169 : vector<8x8xf32> to vector<8x8xbf16>
    %cst_95 = arith.constant dense<0.000000e+00> : vector<8x8xf32>
    %171 = tpu.matmul %166, %168, %cst_95 {dimension_numbers = #tpu.dot_dimension_numbers<[1], [1], [0], [0], [0, 0, 1, 0], [], []>} : vector<8x8xbf16>, vector<8x8xbf16>, vector<8x8xf32> -> vector<8x8xf32>
    %cst_96 = arith.constant dense<0xFF800000> : vector<8xf32>
    %172 = vector.multi_reduction <maximumf>, %171, %cst_96 [1] : vector<8x8xf32> to vector<8xf32>
    %173 = vector.shape_cast %172 : vector<8xf32> to vector<8x1xf32>
    %174 = vector.broadcast %173 : vector<8x1xf32> to vector<8x8xf32>
    %175 = arith.subf %171, %174 : vector<8x8xf32>
    %176 = math.exp %175 : vector<8x8xf32>
    %177 = arith.truncf %176 : vector<8x8xf32> to vector<8x8xbf16>
    %cst_97 = arith.constant dense<0.000000e+00> : vector<8x8xf32>
    %178 = tpu.matmul %177, %170, %cst_97 {dimension_numbers = #tpu.dot_dimension_numbers<[1], [0], [0], [1], [0, 0, 1, 1], [], []>} : vector<8x8xbf16>, vector<8x8xbf16>, vector<8x8xf32> -> vector<8x8xf32>
    %cst_98 = arith.constant dense<0.000000e+00> : vector<8xf32>
    %179 = vector.multi_reduction <add>, %176, %cst_98 [1] : vector<8x8xf32> to vector<8xf32>
    %180 = vector.shape_cast %179 : vector<8xf32> to vector<8x1xf32>
    %181 = tpu.reciprocal %180 {approx = true} : vector<8x1xf32> -> vector<8x1xf32>
    %182 = vector.broadcast %181 : vector<8x1xf32> to vector<8x8xf32>
    %183 = arith.mulf %178, %182 : vector<8x8xf32>
    %184 = arith.truncf %183 : vector<8x8xf32> to vector<8x8xbf16>
    %c1_99 = arith.constant 1 : index
    %c0_100 = arith.constant 0 : index
    %c0_101 = arith.constant 0 : index
    %185 = vector.load %arg6[%c1_99, %c0_100, %c0_101] : memref<4x8x32xbf16, #tpu.memory_space<vmem>>, vector<1x8x32xbf16>
    %186 = vector.shape_cast %185 : vector<1x8x32xbf16> to vector<8x32xbf16>
    %cst_102 = arith.constant dense<0.000000e+00> : vector<8x32xf32>
    %187 = tpu.matmul %184, %186, %cst_102 {dimension_numbers = #tpu.dot_dimension_numbers<[1], [0], [0], [1], [0, 0, 1, 1], [], []>} : vector<8x8xbf16>, vector<8x32xbf16>, vector<8x32xf32> -> vector<8x32xf32>
    %188 = arith.addf %164, %187 : vector<8x32xf32>
    %189 = vector.extract_strided_slice %24 {offsets = [8, 0], sizes = [8, 8], strides = [1, 1]} : vector<16x8xf32> to vector<8x8xf32>
    %190 = arith.truncf %189 : vector<8x8xf32> to vector<8x8xbf16>
    %191 = vector.extract_strided_slice %27 {offsets = [8, 0], sizes = [8, 8], strides = [1, 1]} : vector<16x8xf32> to vector<8x8xf32>
    %192 = arith.truncf %191 : vector<8x8xf32> to vector<8x8xbf16>
    %193 = vector.extract_strided_slice %30 {offsets = [8, 0], sizes = [8, 8], strides = [1, 1]} : vector<16x8xf32> to vector<8x8xf32>
    %194 = arith.truncf %193 : vector<8x8xf32> to vector<8x8xbf16>
    %cst_103 = arith.constant dense<0.000000e+00> : vector<8x8xf32>
    %195 = tpu.matmul %190, %192, %cst_103 {dimension_numbers = #tpu.dot_dimension_numbers<[1], [1], [0], [0], [0, 0, 1, 0], [], []>} : vector<8x8xbf16>, vector<8x8xbf16>, vector<8x8xf32> -> vector<8x8xf32>
    %cst_104 = arith.constant dense<0xFF800000> : vector<8xf32>
    %196 = vector.multi_reduction <maximumf>, %195, %cst_104 [1] : vector<8x8xf32> to vector<8xf32>
    %197 = vector.shape_cast %196 : vector<8xf32> to vector<8x1xf32>
    %198 = vector.broadcast %197 : vector<8x1xf32> to vector<8x8xf32>
    %199 = arith.subf %195, %198 : vector<8x8xf32>
    %200 = math.exp %199 : vector<8x8xf32>
    %201 = arith.truncf %200 : vector<8x8xf32> to vector<8x8xbf16>
    %cst_105 = arith.constant dense<0.000000e+00> : vector<8x8xf32>
    %202 = tpu.matmul %201, %194, %cst_105 {dimension_numbers = #tpu.dot_dimension_numbers<[1], [0], [0], [1], [0, 0, 1, 1], [], []>} : vector<8x8xbf16>, vector<8x8xbf16>, vector<8x8xf32> -> vector<8x8xf32>
    %cst_106 = arith.constant dense<0.000000e+00> : vector<8xf32>
    %203 = vector.multi_reduction <add>, %200, %cst_106 [1] : vector<8x8xf32> to vector<8xf32>
    %204 = vector.shape_cast %203 : vector<8xf32> to vector<8x1xf32>
    %205 = tpu.reciprocal %204 {approx = true} : vector<8x1xf32> -> vector<8x1xf32>
    %206 = vector.broadcast %205 : vector<8x1xf32> to vector<8x8xf32>
    %207 = arith.mulf %202, %206 : vector<8x8xf32>
    %208 = arith.truncf %207 : vector<8x8xf32> to vector<8x8xbf16>
    %c2_107 = arith.constant 2 : index
    %c0_108 = arith.constant 0 : index
    %c0_109 = arith.constant 0 : index
    %209 = vector.load %arg6[%c2_107, %c0_108, %c0_109] : memref<4x8x32xbf16, #tpu.memory_space<vmem>>, vector<1x8x32xbf16>
    %210 = vector.shape_cast %209 : vector<1x8x32xbf16> to vector<8x32xbf16>
    %cst_110 = arith.constant dense<0.000000e+00> : vector<8x32xf32>
    %211 = tpu.matmul %208, %210, %cst_110 {dimension_numbers = #tpu.dot_dimension_numbers<[1], [0], [0], [1], [0, 0, 1, 1], [], []>} : vector<8x8xbf16>, vector<8x32xbf16>, vector<8x32xf32> -> vector<8x32xf32>
    %212 = arith.addf %188, %211 : vector<8x32xf32>
    %213 = vector.extract_strided_slice %33 {offsets = [8, 0], sizes = [8, 8], strides = [1, 1]} : vector<16x8xf32> to vector<8x8xf32>
    %214 = arith.truncf %213 : vector<8x8xf32> to vector<8x8xbf16>
    %215 = vector.extract_strided_slice %36 {offsets = [8, 0], sizes = [8, 8], strides = [1, 1]} : vector<16x8xf32> to vector<8x8xf32>
    %216 = arith.truncf %215 : vector<8x8xf32> to vector<8x8xbf16>
    %217 = vector.extract_strided_slice %39 {offsets = [8, 0], sizes = [8, 8], strides = [1, 1]} : vector<16x8xf32> to vector<8x8xf32>
    %218 = arith.truncf %217 : vector<8x8xf32> to vector<8x8xbf16>
    %cst_111 = arith.constant dense<0.000000e+00> : vector<8x8xf32>
    %219 = tpu.matmul %214, %216, %cst_111 {dimension_numbers = #tpu.dot_dimension_numbers<[1], [1], [0], [0], [0, 0, 1, 0], [], []>} : vector<8x8xbf16>, vector<8x8xbf16>, vector<8x8xf32> -> vector<8x8xf32>
    %cst_112 = arith.constant dense<0xFF800000> : vector<8xf32>
    %220 = vector.multi_reduction <maximumf>, %219, %cst_112 [1] : vector<8x8xf32> to vector<8xf32>
    %221 = vector.shape_cast %220 : vector<8xf32> to vector<8x1xf32>
    %222 = vector.broadcast %221 : vector<8x1xf32> to vector<8x8xf32>
    %223 = arith.subf %219, %222 : vector<8x8xf32>
    %224 = math.exp %223 : vector<8x8xf32>
    %225 = arith.truncf %224 : vector<8x8xf32> to vector<8x8xbf16>
    %cst_113 = arith.constant dense<0.000000e+00> : vector<8x8xf32>
    %226 = tpu.matmul %225, %218, %cst_113 {dimension_numbers = #tpu.dot_dimension_numbers<[1], [0], [0], [1], [0, 0, 1, 1], [], []>} : vector<8x8xbf16>, vector<8x8xbf16>, vector<8x8xf32> -> vector<8x8xf32>
    %cst_114 = arith.constant dense<0.000000e+00> : vector<8xf32>
    %227 = vector.multi_reduction <add>, %224, %cst_114 [1] : vector<8x8xf32> to vector<8xf32>
    %228 = vector.shape_cast %227 : vector<8xf32> to vector<8x1xf32>
    %229 = tpu.reciprocal %228 {approx = true} : vector<8x1xf32> -> vector<8x1xf32>
    %230 = vector.broadcast %229 : vector<8x1xf32> to vector<8x8xf32>
    %231 = arith.mulf %226, %230 : vector<8x8xf32>
    %232 = arith.truncf %231 : vector<8x8xf32> to vector<8x8xbf16>
    %c3_115 = arith.constant 3 : index
    %c0_116 = arith.constant 0 : index
    %c0_117 = arith.constant 0 : index
    %233 = vector.load %arg6[%c3_115, %c0_116, %c0_117] : memref<4x8x32xbf16, #tpu.memory_space<vmem>>, vector<1x8x32xbf16>
    %234 = vector.shape_cast %233 : vector<1x8x32xbf16> to vector<8x32xbf16>
    %cst_118 = arith.constant dense<0.000000e+00> : vector<8x32xf32>
    %235 = tpu.matmul %232, %234, %cst_118 {dimension_numbers = #tpu.dot_dimension_numbers<[1], [0], [0], [1], [0, 0, 1, 1], [], []>} : vector<8x8xbf16>, vector<8x32xbf16>, vector<8x32xf32> -> vector<8x32xf32>
    %236 = arith.addf %212, %235 : vector<8x32xf32>
    %237 = vector.broadcast %3 : vector<1x32xf32> to vector<8x32xf32>
    %238 = arith.addf %236, %237 : vector<8x32xf32>
    %c8 = arith.constant 8 : index
    %c0_119 = arith.constant 0 : index
    %239 = vector.load %arg8[%c8, %c0_119] : memref<16x32xf32, #tpu.memory_space<vmem>>, vector<8x32xf32>
    tpu.vector_store %arg8[%c8, %c0_119], %238 {strides = array<i32>} : memref<16x32xf32, #tpu.memory_space<vmem>>, vector<8x32xf32>,
    return
  }
}

</mosaic_0001>

<llo_original>
// kernel: tpu_custom_call.1
$region0: #{tpu_custom_call.1}
  #allocation0 [shape = 'u32[]', space=smem, size = 0x4, offset = 0x4, fixed_abs, tag = 'smem constant byte address 0x4 - core index']
  #allocation1 [shape = 'u32[144,128]{1,0:T(1,128)}', space=vmem, size = 0x12000, scoped, tag = 'internal scratch']
  %s0 = inlined_call_operand.vmem [shape: bf16[16,32], index: 0, kind: input, shape index: {}]
  %s1 = inlined_call_operand.vmem [shape: bf16[16,32], index: 1, kind: input, shape index: {}]
  %s2 = inlined_call_operand.vmem [shape: bf16[16,32], index: 2, kind: input, shape index: {}]
  %s3 = inlined_call_operand.vmem [shape: bf16[4,32,8], index: 3, kind: input, shape index: {}]
  %s4 = inlined_call_operand.vmem [shape: bf16[4,32,8], index: 4, kind: input, shape index: {}]
  %s5 = inlined_call_operand.vmem [shape: bf16[4,32,8], index: 5, kind: input, shape index: {}]
  %s6 = inlined_call_operand.vmem [shape: bf16[4,8,32], index: 6, kind: input, shape index: {}]
  %s7 = inlined_call_operand.vmem [shape: f32[1,32], index: 7, kind: input, shape index: {}]
  %s8 = inlined_call_operand.hbm [shape: f32[16,32], index: 8, kind: output, shape index: {}]
  %s9 = sld [smem:[#allocation0]]
  $region42: #{tpu_custom_call.1} parent=0
    _
  %s11 = ssub.s32 1, %s9
  %s12 = scalar_select 0, %s11, %s9
  $region1: #{tpu_custom_call.1} parent=0
    #allocation2 [shape = 'u8[8192]{0}', space=vmem, size = 0x2000, scoped, tag = 'output window, operand 0, single buffered']
    #allocation3 [shape = 's32[1]{0}', space=sflag, size = 0x4, scoped, tag = 'scoped memory for tpu_custom_call.1']
    %13 = vsyncpa [#allocation3], 0
    // Predicated region
    $region2: #{tpu_custom_call.1} parent=1 // pred_check
      _
    $region3: #{tpu_custom_call.1} parent=1 // pred_check_branch
      %15 = sbr.rel (0) target = $region5
    $region4: #{tpu_custom_call.1} parent=1 // pred_region
      _
    $region5: #{tpu_custom_call.1} parent=1 // pred_fallthru
      _
    // Predicated region
    $region6: #{tpu_custom_call.1} parent=1 // pred_check
      _
    $region7: #{tpu_custom_call.1} parent=1 // pred_check_branch
      %17 = sbr.rel (0) target = $region9
    $region8: #{tpu_custom_call.1} parent=1 // pred_region
      _
    $region9: #{tpu_custom_call.1} parent=1 // pred_fallthru
      _
    // Predicated region
    $region10: #{tpu_custom_call.1} parent=1 // pred_check
      _
    $region11: #{tpu_custom_call.1} parent=1 // pred_check_branch
      %19 = sbr.rel (0) target = $region13
    $region12: #{tpu_custom_call.1} parent=1 // pred_region
      _
    $region13: #{tpu_custom_call.1} parent=1 // pred_fallthru
      _
    // Predicated region
    $region14: #{tpu_custom_call.1} parent=1 // pred_check
      _
    $region15: #{tpu_custom_call.1} parent=1 // pred_check_branch
      %21 = sbr.rel (0) target = $region17
    $region16: #{tpu_custom_call.1} parent=1 // pred_region
      _
    $region17: #{tpu_custom_call.1} parent=1 // pred_fallthru
      _
    // Predicated region
    $region18: #{tpu_custom_call.1} parent=1 // pred_check
      _
    $region19: #{tpu_custom_call.1} parent=1 // pred_check_branch
      %23 = sbr.rel (0) target = $region21
    $region20: #{tpu_custom_call.1} parent=1 // pred_region
      _
    $region21: #{tpu_custom_call.1} parent=1 // pred_fallthru
      _
    // Predicated region
    $region22: #{tpu_custom_call.1} parent=1 // pred_check
      _
    $region23: #{tpu_custom_call.1} parent=1 // pred_check_branch
      %25 = sbr.rel (0) target = $region25
    $region24: #{tpu_custom_call.1} parent=1 // pred_region
      _
    $region25: #{tpu_custom_call.1} parent=1 // pred_fallthru
      _
    // Predicated region
    $region26: #{tpu_custom_call.1} parent=1 // pred_check
      _
    $region27: #{tpu_custom_call.1} parent=1 // pred_check_branch
      %27 = sbr.rel (0) target = $region29
    $region28: #{tpu_custom_call.1} parent=1 // pred_region
      _
    $region29: #{tpu_custom_call.1} parent=1 // pred_fallthru
      _
    // Predicated region
    $region30: #{tpu_custom_call.1} parent=1 // pred_check
      _
    $region31: #{tpu_custom_call.1} parent=1 // pred_check_branch
      %29 = sbr.rel (0) target = $region33
    $region32: #{tpu_custom_call.1} parent=1 // pred_region
      _
    $region33: #{tpu_custom_call.1} parent=1 // pred_fallthru
      _
    %v31 = vld [vmem:[%s0] sm:$0xf]
    %v32 = vld [vmem:[%s0 + $0x4] sm:$0xf]
    %v33 = vld [vmem:[%s1] sm:$0xf]
    %v34 = vld [vmem:[%s1 + $0x4] sm:$0xf]
    %v35 = vld [vmem:[%s2] sm:$0xf]
    %v36 = vld [vmem:[%s2 + $0x4] sm:$0xf]
    %v37 = vld [vmem:[%s7] sm:$0x1]
    %v38 = vld [vmem:[%s3] sm:$0xf]
    %v39 = vld [vmem:[%s3 + $0x4] sm:$0xf]
    %v40 = vld [vmem:[%s3 + $0x8] sm:$0xf]
    %v41 = vld [vmem:[%s3 + $0xc] sm:$0xf]
    %v44 = vunpack.c.l.b16 %v31
    %v45 = vunpack.c.l.b16 %v32
    %v46 = vpack.c.b16 %v45, %v44
    %v51 = vunpack.c.l.b16 %v38
    %v52 = vunpack.c.l.b16 %v39
    %v53 = vunpack.c.l.b16 %v40
    %v54 = vunpack.c.l.b16 %v41
    %v55 = vpack.c.b16 %v52, %v51
    %v56 = vpack.c.b16 %v54, %v53
    %vm59 = vcmask 261120
    %v61 = vsel %vm59, %v46, 0
    %63 = vmatprep.subr.bf16.mxu0 0
    %64 = vmatpush1.bf16.msra.mxu0 0
    %65 = vmatprep.subr.bf16.mxu0 0
    %66 = vmatpush1.bf16.msra.mxu0 0
    %67 = vmatprep.subr.bf16.mxu0 0
    %68 = vmatpush1.bf16.msra.mxu0 0
    %69 = vmatprep.subr.bf16.mxu0 0
    %70 = vmatpush1.bf16.msra.mxu0 0
    %71 = vmatprep.subr.bf16.mxu0 0
    %72 = vmatpush1.bf16.msra.mxu0 0
    %73 = vmatprep.subr.bf16.mxu0 0
    %74 = vmatpush1.bf16.msra.mxu0 0
    %75 = vmatprep.subr.bf16.mxu0 0
    %76 = vmatpush1.bf16.msra.mxu0 %v56
    %77 = vmatprep.subr.bf16.mxu0 0
    %78 = vmatpush1.bf16.msra.mxu0 %v55
    %79 = vmatprep.subr.bf16.mxu0 0
    %80 = vmatpush2.bf16.msra.mxu0 0
    %81 = vmatprep.subr.bf16.mxu0 0
    %82 = vmatpush2.bf16.msra.mxu0 0
    %83 = vmatprep.subr.bf16.mxu0 0
    %84 = vmatpush2.bf16.msra.mxu0 0
    %85 = vmatprep.subr.bf16.mxu0 0
    %86 = vmatpush2.bf16.msra.mxu0 0
    %87 = vmatprep.subr.bf16.mxu0 0
    %88 = vmatpush2.bf16.msra.mxu0 0
    %89 = vmatprep.subr.bf16.mxu0 0
    %90 = vmatpush2.bf16.msra.mxu0 0
    %91 = vmatprep.subr.bf16.mxu0 0
    %92 = vmatpush2.bf16.msra.mxu0 0
    %93 = vmatprep.subr.bf16.mxu0 0
    %94 = vmatpush2.bf16.msra.mxu0 0
    %95 = vmatprep.mubr.bf16.mxu0 0
    %96 = vmatmul.mubr.bf16.gmra.mxu0 %v61
    %v97 = vpop.f32.mrf.mxu0
    %v98 = vadd.f32 0.0, %v97
    %v99 = vpop.f32.mrf.mxu0
    %v100 = vpop.f32.mrf.mxu0
    %v101 = vadd.f32 0.0, %v100
    %v102 = vpop.f32.mrf.mxu0
    %103 = vdwg.mxu0
    %v104 = vld [vmem:[%s4] sm:$0xf]
    %v105 = vld [vmem:[%s4 + $0x4] sm:$0xf]
    %v106 = vld [vmem:[%s4 + $0x8] sm:$0xf]
    %v107 = vld [vmem:[%s4 + $0xc] sm:$0xf]
    %v110 = vunpack.c.l.b16 %v33
    %v111 = vunpack.c.l.b16 %v34
    %v112 = vpack.c.b16 %v111, %v110
    %v117 = vunpack.c.l.b16 %v104
    %v118 = vunpack.c.l.b16 %v105
    %v119 = vunpack.c.l.b16 %v106
    %v120 = vunpack.c.l.b16 %v107
    %v121 = vpack.c.b16 %v118, %v117
    %v122 = vpack.c.b16 %v120, %v119
    %v126 = vsel %vm59, %v112, 0
    %128 = vmatprep.subr.bf16.mxu0 0
    %129 = vmatpush1.bf16.msra.mxu0 0
    %130 = vmatprep.subr.bf16.mxu0 0
    %131 = vmatpush1.bf16.msra.mxu0 0
    %132 = vmatprep.subr.bf16.mxu0 0
    %133 = vmatpush1.bf16.msra.mxu0 0
    %134 = vmatprep.subr.bf16.mxu0 0
    %135 = vmatpush1.bf16.msra.mxu0 0
    %136 = vmatprep.subr.bf16.mxu0 0
    %137 = vmatpush1.bf16.msra.mxu0 0
    %138 = vmatprep.subr.bf16.mxu0 0
    %139 = vmatpush1.bf16.msra.mxu0 0
    %140 = vmatprep.subr.bf16.mxu0 0
    %141 = vmatpush1.bf16.msra.mxu0 %v122
    %142 = vmatprep.subr.bf16.mxu0 0
    %143 = vmatpush1.bf16.msra.mxu0 %v121
    %144 = vmatprep.subr.bf16.mxu0 0
    %145 = vmatpush2.bf16.msra.mxu0 0
    %146 = vmatprep.subr.bf16.mxu0 0
    %147 = vmatpush2.bf16.msra.mxu0 0
    %148 = vmatprep.subr.bf16.mxu0 0
    %149 = vmatpush2.bf16.msra.mxu0 0
    %150 = vmatprep.subr.bf16.mxu0 0
    %151 = vmatpush2.bf16.msra.mxu0 0
    %152 = vmatprep.subr.bf16.mxu0 0
    %153 = vmatpush2.bf16.msra.mxu0 0
    %154 = vmatprep.subr.bf16.mxu0 0
    %155 = vmatpush2.bf16.msra.mxu0 0
    %156 = vmatprep.subr.bf16.mxu0 0
    %157 = vmatpush2.bf16.msra.mxu0 0
    %158 = vmatprep.subr.bf16.mxu0 0
    %159 = vmatpush2.bf16.msra.mxu0 0
    %160 = vmatprep.mubr.bf16.mxu0 0
    %161 = vmatmul.mubr.bf16.gmra.mxu0 %v126
    %v162 = vpop.f32.mrf.mxu0
    %v163 = vadd.f32 0.0, %v162
    %v164 = vpop.f32.mrf.mxu0
    %v165 = vpop.f32.mrf.mxu0
    %v166 = vadd.f32 0.0, %v165
    %v167 = vpop.f32.mrf.mxu0
    %168 = vdwg.mxu0
    %v169 = vld [vmem:[%s5] sm:$0xf]
    %v170 = vld [vmem:[%s5 + $0x4] sm:$0xf]
    %v171 = vld [vmem:[%s5 + $0x8] sm:$0xf]
    %v172 = vld [vmem:[%s5 + $0xc] sm:$0xf]
    %v175 = vunpack.c.l.b16 %v35
    %v176 = vunpack.c.l.b16 %v36
    %v177 = vpack.c.b16 %v176, %v175
    %v182 = vunpack.c.l.b16 %v169
    %v183 = vunpack.c.l.b16 %v170
    %v184 = vunpack.c.l.b16 %v171
    %v185 = vunpack.c.l.b16 %v172
    %v186 = vpack.c.b16 %v183, %v182
    %v187 = vpack.c.b16 %v185, %v184
    %v191 = vsel %vm59, %v177, 0
    %193 = vmatprep.subr.bf16.mxu0 0
    %194 = vmatpush1.bf16.msra.mxu0 0
    %195 = vmatprep.subr.bf16.mxu0 0
    %196 = vmatpush1.bf16.msra.mxu0 0
    %197 = vmatprep.subr.bf16.mxu0 0
    %198 = vmatpush1.bf16.msra.mxu0 0
    %199 = vmatprep.subr.bf16.mxu0 0
    %200 = vmatpush1.bf16.msra.mxu0 0
    %201 = vmatprep.subr.bf16.mxu0 0
    %202 = vmatpush1.bf16.msra.mxu0 0
    %203 = vmatprep.subr.bf16.mxu0 0
    %204 = vmatpush1.bf16.msra.mxu0 0
    %205 = vmatprep.subr.bf16.mxu0 0
    %206 = vmatpush1.bf16.msra.mxu0 %v187
    %207 = vmatprep.subr.bf16.mxu0 0
    %208 = vmatpush1.bf16.msra.mxu0 %v186
    %209 = vmatprep.subr.bf16.mxu0 0
    %210 = vmatpush2.bf16.msra.mxu0 0
    %211 = vmatprep.subr.bf16.mxu0 0
    %212 = vmatpush2.bf16.msra.mxu0 0
    %213 = vmatprep.subr.bf16.mxu0 0
    %214 = vmatpush2.bf16.msra.mxu0 0
    %215 = vmatprep.subr.bf16.mxu0 0
    %216 = vmatpush2.bf16.msra.mxu0 0
    %217 = vmatprep.subr.bf16.mxu0 0
    %218 = vmatpush2.bf16.msra.mxu0 0
    %219 = vmatprep.subr.bf16.mxu0 0
    %220 = vmatpush2.bf16.msra.mxu0 0
    %221 = vmatprep.subr.bf16.mxu0 0
    %222 = vmatpush2.bf16.msra.mxu0 0
    %223 = vmatprep.subr.bf16.mxu0 0
    %224 = vmatpush2.bf16.msra.mxu0 0
    %225 = vmatprep.mubr.bf16.mxu0 0
    %226 = vmatmul.mubr.bf16.gmra.mxu0 %v191
    %v227 = vpop.f32.mrf.mxu0
    %v228 = vadd.f32 0.0, %v227
    %v229 = vpop.f32.mrf.mxu0
    %v230 = vpop.f32.mrf.mxu0
    %v231 = vadd.f32 0.0, %v230
    %v232 = vpop.f32.mrf.mxu0
    %233 = vdwg.mxu0
    %s234 = scalar_lea.vmem %s3, 16
    %v235 = vld [vmem:[%s234] sm:$0xf]
    %v236 = vld [vmem:[%s234 + $0x4] sm:$0xf]
    %v237 = vld [vmem:[%s234 + $0x8] sm:$0xf]
    %v238 = vld [vmem:[%s234 + $0xc] sm:$0xf]
    %v243 = vunpack.c.l.b16 %v235
    %v244 = vunpack.c.l.b16 %v236
    %v245 = vunpack.c.l.b16 %v237
    %v246 = vunpack.c.l.b16 %v238
    %v247 = vpack.c.b16 %v244, %v243
    %v248 = vpack.c.b16 %v246, %v245
    %251 = vmatprep.subr.bf16.mxu0 0
    %252 = vmatpush1.bf16.msra.mxu0 0
    %253 = vmatprep.subr.bf16.mxu0 0
    %254 = vmatpush1.bf16.msra.mxu0 0
    %255 = vmatprep.subr.bf16.mxu0 0
    %256 = vmatpush1.bf16.msra.mxu0 0
    %257 = vmatprep.subr.bf16.mxu0 0
    %258 = vmatpush1.bf16.msra.mxu0 0
    %259 = vmatprep.subr.bf16.mxu0 0
    %260 = vmatpush1.bf16.msra.mxu0 0
    %261 = vmatprep.subr.bf16.mxu0 0
    %262 = vmatpush1.bf16.msra.mxu0 0
    %263 = vmatprep.subr.bf16.mxu0 0
    %264 = vmatpush1.bf16.msra.mxu0 %v248
    %265 = vmatprep.subr.bf16.mxu0 0
    %266 = vmatpush1.bf16.msra.mxu0 %v247
    %267 = vmatprep.subr.bf16.mxu0 0
    %268 = vmatpush2.bf16.msra.mxu0 0
    %269 = vmatprep.subr.bf16.mxu0 0
    %270 = vmatpush2.bf16.msra.mxu0 0
    %271 = vmatprep.subr.bf16.mxu0 0
    %272 = vmatpush2.bf16.msra.mxu0 0
    %273 = vmatprep.subr.bf16.mxu0 0
    %274 = vmatpush2.bf16.msra.mxu0 0
    %275 = vmatprep.subr.bf16.mxu0 0
    %276 = vmatpush2.bf16.msra.mxu0 0
    %277 = vmatprep.subr.bf16.mxu0 0
    %278 = vmatpush2.bf16.msra.mxu0 0
    %279 = vmatprep.subr.bf16.mxu0 0
    %280 = vmatpush2.bf16.msra.mxu0 0
    %281 = vmatprep.subr.bf16.mxu0 0
    %282 = vmatpush2.bf16.msra.mxu0 0
    %283 = vmatprep.mubr.bf16.mxu0 0
    %284 = vmatmul.mubr.bf16.gmra.mxu0 %v61
    %v285 = vpop.f32.mrf.mxu0
    %v286 = vadd.f32 0.0, %v285
    %v287 = vpop.f32.mrf.mxu0
    %v288 = vpop.f32.mrf.mxu0
    %v289 = vadd.f32 0.0, %v288
    %v290 = vpop.f32.mrf.mxu0
    %291 = vdwg.mxu0
    %s292 = scalar_lea.vmem %s4, 16
    %v293 = vld [vmem:[%s292] sm:$0xf]
    %v294 = vld [vmem:[%s292 + $0x4] sm:$0xf]
    %v295 = vld [vmem:[%s292 + $0x8] sm:$0xf]
    %v296 = vld [vmem:[%s292 + $0xc] sm:$0xf]
    %v301 = vunpack.c.l.b16 %v293
    %v302 = vunpack.c.l.b16 %v294
    %v303 = vunpack.c.l.b16 %v295
    %v304 = vunpack.c.l.b16 %v296
    %v305 = vpack.c.b16 %v302, %v301
    %v306 = vpack.c.b16 %v304, %v303
    %309 = vmatprep.subr.bf16.mxu0 0
    %310 = vmatpush1.bf16.msra.mxu0 0
    %311 = vmatprep.subr.bf16.mxu0 0
    %312 = vmatpush1.bf16.msra.mxu0 0
    %313 = vmatprep.subr.bf16.mxu0 0
    %314 = vmatpush1.bf16.msra.mxu0 0
    %315 = vmatprep.subr.bf16.mxu0 0
    %316 = vmatpush1.bf16.msra.mxu0 0
    %317 = vmatprep.subr.bf16.mxu0 0
    %318 = vmatpush1.bf16.msra.mxu0 0
    %319 = vmatprep.subr.bf16.mxu0 0
    %320 = vmatpush1.bf16.msra.mxu0 0
    %321 = vmatprep.subr.bf16.mxu0 0
    %322 = vmatpush1.bf16.msra.mxu0 %v306
    %323 = vmatprep.subr.bf16.mxu0 0
    %324 = vmatpush1.bf16.msra.mxu0 %v305
    %325 = vmatprep.subr.bf16.mxu0 0
    %326 = vmatpush2.bf16.msra.mxu0 0
    %327 = vmatprep.subr.bf16.mxu0 0
    %328 = vmatpush2.bf16.msra.mxu0 0
    %329 = vmatprep.subr.bf16.mxu0 0
    %330 = vmatpush2.bf16.msra.mxu0 0
    %331 = vmatprep.subr.bf16.mxu0 0
    %332 = vmatpush2.bf16.msra.mxu0 0
    %333 = vmatprep.subr.bf16.mxu0 0
    %334 = vmatpush2.bf16.msra.mxu0 0
    %335 = vmatprep.subr.bf16.mxu0 0
    %336 = vmatpush2.bf16.msra.mxu0 0
    %337 = vmatprep.subr.bf16.mxu0 0
    %338 = vmatpush2.bf16.msra.mxu0 0
    %339 = vmatprep.subr.bf16.mxu0 0
    %340 = vmatpush2.bf16.msra.mxu0 0
    %341 = vmatprep.mubr.bf16.mxu0 0
    %342 = vmatmul.mubr.bf16.gmra.mxu0 %v126
    %v343 = vpop.f32.mrf.mxu0
    %v344 = vadd.f32 0.0, %v343
    %v345 = vpop.f32.mrf.mxu0
    %v346 = vpop.f32.mrf.mxu0
    %v347 = vadd.f32 0.0, %v346
    %v348 = vpop.f32.mrf.mxu0
    %349 = vdwg.mxu0
    %s350 = scalar_lea.vmem %s5, 16
    %v351 = vld [vmem:[%s350] sm:$0xf]
    %v352 = vld [vmem:[%s350 + $0x4] sm:$0xf]
    %v353 = vld [vmem:[%s350 + $0x8] sm:$0xf]
    %v354 = vld [vmem:[%s350 + $0xc] sm:$0xf]
    %v359 = vunpack.c.l.b16 %v351
    %v360 = vunpack.c.l.b16 %v352
    %v361 = vunpack.c.l.b16 %v353
    %v362 = vunpack.c.l.b16 %v354
    %v363 = vpack.c.b16 %v360, %v359
    %v364 = vpack.c.b16 %v362, %v361
    %367 = vmatprep.subr.bf16.mxu0 0
    %368 = vmatpush1.bf16.msra.mxu0 0
    %369 = vmatprep.subr.bf16.mxu0 0
    %370 = vmatpush1.bf16.msra.mxu0 0
    %371 = vmatprep.subr.bf16.mxu0 0
    %372 = vmatpush1.bf16.msra.mxu0 0
    %373 = vmatprep.subr.bf16.mxu0 0
    %374 = vmatpush1.bf16.msra.mxu0 0
    %375 = vmatprep.subr.bf16.mxu0 0
    %376 = vmatpush1.bf16.msra.mxu0 0
    %377 = vmatprep.subr.bf16.mxu0 0
    %378 = vmatpush1.bf16.msra.mxu0 0
    %379 = vmatprep.subr.bf16.mxu0 0
    %380 = vmatpush1.bf16.msra.mxu0 %v364
    %381 = vmatprep.subr.bf16.mxu0 0
    %382 = vmatpush1.bf16.msra.mxu0 %v363
    %383 = vmatprep.subr.bf16.mxu0 0
    %384 = vmatpush2.bf16.msra.mxu0 0
    %385 = vmatprep.subr.bf16.mxu0 0
    %386 = vmatpush2.bf16.msra.mxu0 0
    %387 = vmatprep.subr.bf16.mxu0 0
    %388 = vmatpush2.bf16.msra.mxu0 0
    %389 = vmatprep.subr.bf16.mxu0 0
    %390 = vmatpush2.bf16.msra.mxu0 0
    %391 = vmatprep.subr.bf16.mxu0 0
    %392 = vmatpush2.bf16.msra.mxu0 0
    %393 = vmatprep.subr.bf16.mxu0 0
    %394 = vmatpush2.bf16.msra.mxu0 0
    %395 = vmatprep.subr.bf16.mxu0 0
    %396 = vmatpush2.bf16.msra.mxu0 0
    %397 = vmatprep.subr.bf16.mxu0 0
    %398 = vmatpush2.bf16.msra.mxu0 0
    %399 = vmatprep.mubr.bf16.mxu0 0
    %400 = vmatmul.mubr.bf16.gmra.mxu0 %v191
    %v401 = vpop.f32.mrf.mxu0
    %v402 = vadd.f32 0.0, %v401
    %v403 = vpop.f32.mrf.mxu0
    %v404 = vpop.f32.mrf.mxu0
    %v405 = vadd.f32 0.0, %v404
    %v406 = vpop.f32.mrf.mxu0
    %407 = vdwg.mxu0
    %s408 = scalar_lea.vmem %s3, 32
    %v409 = vld [vmem:[%s408] sm:$0xf]
    %v410 = vld [vmem:[%s408 + $0x4] sm:$0xf]
    %v411 = vld [vmem:[%s408 + $0x8] sm:$0xf]
    %v412 = vld [vmem:[%s408 + $0xc] sm:$0xf]
    %v417 = vunpack.c.l.b16 %v409
    %v418 = vunpack.c.l.b16 %v410
    %v419 = vunpack.c.l.b16 %v411
    %v420 = vunpack.c.l.b16 %v412
    %v421 = vpack.c.b16 %v418, %v417
    %v422 = vpack.c.b16 %v420, %v419
    %425 = vmatprep.subr.bf16.mxu0 0
    %426 = vmatpush1.bf16.msra.mxu0 0
    %427 = vmatprep.subr.bf16.mxu0 0
    %428 = vmatpush1.bf16.msra.mxu0 0
    %429 = vmatprep.subr.bf16.mxu0 0
    %430 = vmatpush1.bf16.msra.mxu0 0
    %431 = vmatprep.subr.bf16.mxu0 0
    %432 = vmatpush1.bf16.msra.mxu0 0
    %433 = vmatprep.subr.bf16.mxu0 0
    %434 = vmatpush1.bf16.msra.mxu0 0
    %435 = vmatprep.subr.bf16.mxu0 0
    %436 = vmatpush1.bf16.msra.mxu0 0
    %437 = vmatprep.subr.bf16.mxu0 0
    %438 = vmatpush1.bf16.msra.mxu0 %v422
    %439 = vmatprep.subr.bf16.mxu0 0
    %440 = vmatpush1.bf16.msra.mxu0 %v421
    %441 = vmatprep.subr.bf16.mxu0 0
    %442 = vmatpush2.bf16.msra.mxu0 0
    %443 = vmatprep.subr.bf16.mxu0 0
    %444 = vmatpush2.bf16.msra.mxu0 0
    %445 = vmatprep.subr.bf16.mxu0 0
    %446 = vmatpush2.bf16.msra.mxu0 0
    %447 = vmatprep.subr.bf16.mxu0 0
    %448 = vmatpush2.bf16.msra.mxu0 0
    %449 = vmatprep.subr.bf16.mxu0 0
    %450 = vmatpush2.bf16.msra.mxu0 0
    %451 = vmatprep.subr.bf16.mxu0 0
    %452 = vmatpush2.bf16.msra.mxu0 0
    %453 = vmatprep.subr.bf16.mxu0 0
    %454 = vmatpush2.bf16.msra.mxu0 0
    %455 = vmatprep.subr.bf16.mxu0 0
    %456 = vmatpush2.bf16.msra.mxu0 0
    %457 = vmatprep.mubr.bf16.mxu0 0
    %458 = vmatmul.mubr.bf16.gmra.mxu0 %v61
    %v459 = vpop.f32.mrf.mxu0
    %v460 = vadd.f32 0.0, %v459
    %v461 = vpop.f32.mrf.mxu0
    %v462 = vpop.f32.mrf.mxu0
    %v463 = vadd.f32 0.0, %v462
    %v464 = vpop.f32.mrf.mxu0
    %465 = vdwg.mxu0
    %s466 = scalar_lea.vmem %s4, 32
    %v467 = vld [vmem:[%s466] sm:$0xf]
    %v468 = vld [vmem:[%s466 + $0x4] sm:$0xf]
    %v469 = vld [vmem:[%s466 + $0x8] sm:$0xf]
    %v470 = vld [vmem:[%s466 + $0xc] sm:$0xf]
    %v475 = vunpack.c.l.b16 %v467
    %v476 = vunpack.c.l.b16 %v468
    %v477 = vunpack.c.l.b16 %v469
    %v478 = vunpack.c.l.b16 %v470
    %v479 = vpack.c.b16 %v476, %v475
    %v480 = vpack.c.b16 %v478, %v477
    %483 = vmatprep.subr.bf16.mxu0 0
    %484 = vmatpush1.bf16.msra.mxu0 0
    %485 = vmatprep.subr.bf16.mxu0 0
    %486 = vmatpush1.bf16.msra.mxu0 0
    %487 = vmatprep.subr.bf16.mxu0 0
    %488 = vmatpush1.bf16.msra.mxu0 0
    %489 = vmatprep.subr.bf16.mxu0 0
    %490 = vmatpush1.bf16.msra.mxu0 0
    %491 = vmatprep.subr.bf16.mxu0 0
    %492 = vmatpush1.bf16.msra.mxu0 0
    %493 = vmatprep.subr.bf16.mxu0 0
    %494 = vmatpush1.bf16.msra.mxu0 0
    %495 = vmatprep.subr.bf16.mxu0 0
    %496 = vmatpush1.bf16.msra.mxu0 %v480
    %497 = vmatprep.subr.bf16.mxu0 0
    %498 = vmatpush1.bf16.msra.mxu0 %v479
    %499 = vmatprep.subr.bf16.mxu0 0
    %500 = vmatpush2.bf16.msra.mxu0 0
    %501 = vmatprep.subr.bf16.mxu0 0
    %502 = vmatpush2.bf16.msra.mxu0 0
    %503 = vmatprep.subr.bf16.mxu0 0
    %504 = vmatpush2.bf16.msra.mxu0 0
    %505 = vmatprep.subr.bf16.mxu0 0
    %506 = vmatpush2.bf16.msra.mxu0 0
    %507 = vmatprep.subr.bf16.mxu0 0
    %508 = vmatpush2.bf16.msra.mxu0 0
    %509 = vmatprep.subr.bf16.mxu0 0
    %510 = vmatpush2.bf16.msra.mxu0 0
    %511 = vmatprep.subr.bf16.mxu0 0
    %512 = vmatpush2.bf16.msra.mxu0 0
    %513 = vmatprep.subr.bf16.mxu0 0
    %514 = vmatpush2.bf16.msra.mxu0 0
    %515 = vmatprep.mubr.bf16.mxu0 0
    %516 = vmatmul.mubr.bf16.gmra.mxu0 %v126
    %v517 = vpop.f32.mrf.mxu0
    %v518 = vadd.f32 0.0, %v517
    %v519 = vpop.f32.mrf.mxu0
    %v520 = vpop.f32.mrf.mxu0
    %v521 = vadd.f32 0.0, %v520
    %v522 = vpop.f32.mrf.mxu0
    %523 = vdwg.mxu0
    %s524 = scalar_lea.vmem %s5, 32
    %v525 = vld [vmem:[%s524] sm:$0xf]
    %v526 = vld [vmem:[%s524 + $0x4] sm:$0xf]
    %v527 = vld [vmem:[%s524 + $0x8] sm:$0xf]
    %v528 = vld [vmem:[%s524 + $0xc] sm:$0xf]
    %v533 = vunpack.c.l.b16 %v525
    %v534 = vunpack.c.l.b16 %v526
    %v535 = vunpack.c.l.b16 %v527
    %v536 = vunpack.c.l.b16 %v528
    %v537 = vpack.c.b16 %v534, %v533
    %v538 = vpack.c.b16 %v536, %v535
    %541 = vmatprep.subr.bf16.mxu0 0
    %542 = vmatpush1.bf16.msra.mxu0 0
    %543 = vmatprep.subr.bf16.mxu0 0
    %544 = vmatpush1.bf16.msra.mxu0 0
    %545 = vmatprep.subr.bf16.mxu0 0
    %546 = vmatpush1.bf16.msra.mxu0 0
    %547 = vmatprep.subr.bf16.mxu0 0
    %548 = vmatpush1.bf16.msra.mxu0 0
    %549 = vmatprep.subr.bf16.mxu0 0
    %550 = vmatpush1.bf16.msra.mxu0 0
    %551 = vmatprep.subr.bf16.mxu0 0
    %552 = vmatpush1.bf16.msra.mxu0 0
    %553 = vmatprep.subr.bf16.mxu0 0
    %554 = vmatpush1.bf16.msra.mxu0 %v538
    %555 = vmatprep.subr.bf16.mxu0 0
    %556 = vmatpush1.bf16.msra.mxu0 %v537
    %557 = vmatprep.subr.bf16.mxu0 0
    %558 = vmatpush2.bf16.msra.mxu0 0
    %559 = vmatprep.subr.bf16.mxu0 0
    %560 = vmatpush2.bf16.msra.mxu0 0
    %561 = vmatprep.subr.bf16.mxu0 0
    %562 = vmatpush2.bf16.msra.mxu0 0
    %563 = vmatprep.subr.bf16.mxu0 0
    %564 = vmatpush2.bf16.msra.mxu0 0
    %565 = vmatprep.subr.bf16.mxu0 0
    %566 = vmatpush2.bf16.msra.mxu0 0
    %567 = vmatprep.subr.bf16.mxu0 0
    %568 = vmatpush2.bf16.msra.mxu0 0
    %569 = vmatprep.subr.bf16.mxu0 0
    %570 = vmatpush2.bf16.msra.mxu0 0
    %571 = vmatprep.subr.bf16.mxu0 0
    %572 = vmatpush2.bf16.msra.mxu0 0
    %573 = vmatprep.mubr.bf16.mxu0 0
    %574 = vmatmul.mubr.bf16.gmra.mxu0 %v191
    %v575 = vpop.f32.mrf.mxu0
    %v576 = vadd.f32 0.0, %v575
    %v577 = vpop.f32.mrf.mxu0
    %v578 = vpop.f32.mrf.mxu0
    %v579 = vadd.f32 0.0, %v578
    %v580 = vpop.f32.mrf.mxu0
    %581 = vdwg.mxu0
    %s582 = scalar_lea.vmem %s3, 48
    %v583 = vld [vmem:[%s582] sm:$0xf]
    %v584 = vld [vmem:[%s582 + $0x4] sm:$0xf]
    %v585 = vld [vmem:[%s582 + $0x8] sm:$0xf]
    %v586 = vld [vmem:[%s582 + $0xc] sm:$0xf]
    %v591 = vunpack.c.l.b16 %v583
    %v592 = vunpack.c.l.b16 %v584
    %v593 = vunpack.c.l.b16 %v585
    %v594 = vunpack.c.l.b16 %v586
    %v595 = vpack.c.b16 %v592, %v591
    %v596 = vpack.c.b16 %v594, %v593
    %599 = vmatprep.subr.bf16.mxu0 0
    %600 = vmatpush1.bf16.msra.mxu0 0
    %601 = vmatprep.subr.bf16.mxu0 0
    %602 = vmatpush1.bf16.msra.mxu0 0
    %603 = vmatprep.subr.bf16.mxu0 0
    %604 = vmatpush1.bf16.msra.mxu0 0
    %605 = vmatprep.subr.bf16.mxu0 0
    %606 = vmatpush1.bf16.msra.mxu0 0
    %607 = vmatprep.subr.bf16.mxu0 0
    %608 = vmatpush1.bf16.msra.mxu0 0
    %609 = vmatprep.subr.bf16.mxu0 0
    %610 = vmatpush1.bf16.msra.mxu0 0
    %611 = vmatprep.subr.bf16.mxu0 0
    %612 = vmatpush1.bf16.msra.mxu0 %v596
    %613 = vmatprep.subr.bf16.mxu0 0
    %614 = vmatpush1.bf16.msra.mxu0 %v595
    %615 = vmatprep.subr.bf16.mxu0 0
    %616 = vmatpush2.bf16.msra.mxu0 0
    %617 = vmatprep.subr.bf16.mxu0 0
    %618 = vmatpush2.bf16.msra.mxu0 0
    %619 = vmatprep.subr.bf16.mxu0 0
    %620 = vmatpush2.bf16.msra.mxu0 0
    %621 = vmatprep.subr.bf16.mxu0 0
    %622 = vmatpush2.bf16.msra.mxu0 0
    %623 = vmatprep.subr.bf16.mxu0 0
    %624 = vmatpush2.bf16.msra.mxu0 0
    %625 = vmatprep.subr.bf16.mxu0 0
    %626 = vmatpush2.bf16.msra.mxu0 0
    %627 = vmatprep.subr.bf16.mxu0 0
    %628 = vmatpush2.bf16.msra.mxu0 0
    %629 = vmatprep.subr.bf16.mxu0 0
    %630 = vmatpush2.bf16.msra.mxu0 0
    %631 = vmatprep.mubr.bf16.mxu0 0
    %632 = vmatmul.mubr.bf16.gmra.mxu0 %v61
    %v633 = vpop.f32.mrf.mxu0
    %v634 = vadd.f32 0.0, %v633
    %v635 = vpop.f32.mrf.mxu0
    %v636 = vpop.f32.mrf.mxu0
    %v637 = vadd.f32 0.0, %v636
    %v638 = vpop.f32.mrf.mxu0
    %639 = vdwg.mxu0
    %s640 = scalar_lea.vmem %s4, 48
    %v641 = vld [vmem:[%s640] sm:$0xf]
    %v642 = vld [vmem:[%s640 + $0x4] sm:$0xf]
    %v643 = vld [vmem:[%s640 + $0x8] sm:$0xf]
    %v644 = vld [vmem:[%s640 + $0xc] sm:$0xf]
    %v649 = vunpack.c.l.b16 %v641
    %v650 = vunpack.c.l.b16 %v642
    %v651 = vunpack.c.l.b16 %v643
    %v652 = vunpack.c.l.b16 %v644
    %v653 = vpack.c.b16 %v650, %v649
    %v654 = vpack.c.b16 %v652, %v651
    %657 = vmatprep.subr.bf16.mxu0 0
    %658 = vmatpush1.bf16.msra.mxu0 0
    %659 = vmatprep.subr.bf16.mxu0 0
    %660 = vmatpush1.bf16.msra.mxu0 0
    %661 = vmatprep.subr.bf16.mxu0 0
    %662 = vmatpush1.bf16.msra.mxu0 0
    %663 = vmatprep.subr.bf16.mxu0 0
    %664 = vmatpush1.bf16.msra.mxu0 0
    %665 = vmatprep.subr.bf16.mxu0 0
    %666 = vmatpush1.bf16.msra.mxu0 0
    %667 = vmatprep.subr.bf16.mxu0 0
    %668 = vmatpush1.bf16.msra.mxu0 0
    %669 = vmatprep.subr.bf16.mxu0 0
    %670 = vmatpush1.bf16.msra.mxu0 %v654
    %671 = vmatprep.subr.bf16.mxu0 0
    %672 = vmatpush1.bf16.msra.mxu0 %v653
    %673 = vmatprep.subr.bf16.mxu0 0
    %674 = vmatpush2.bf16.msra.mxu0 0
    %675 = vmatprep.subr.bf16.mxu0 0
    %676 = vmatpush2.bf16.msra.mxu0 0
    %677 = vmatprep.subr.bf16.mxu0 0
    %678 = vmatpush2.bf16.msra.mxu0 0
    %679 = vmatprep.subr.bf16.mxu0 0
    %680 = vmatpush2.bf16.msra.mxu0 0
    %681 = vmatprep.subr.bf16.mxu0 0
    %682 = vmatpush2.bf16.msra.mxu0 0
    %683 = vmatprep.subr.bf16.mxu0 0
    %684 = vmatpush2.bf16.msra.mxu0 0
    %685 = vmatprep.subr.bf16.mxu0 0
    %686 = vmatpush2.bf16.msra.mxu0 0
    %687 = vmatprep.subr.bf16.mxu0 0
    %688 = vmatpush2.bf16.msra.mxu0 0
    %689 = vmatprep.mubr.bf16.mxu0 0
    %690 = vmatmul.mubr.bf16.gmra.mxu0 %v126
    %v691 = vpop.f32.mrf.mxu0
    %v692 = vadd.f32 0.0, %v691
    %v693 = vpop.f32.mrf.mxu0
    %v694 = vpop.f32.mrf.mxu0
    %v695 = vadd.f32 0.0, %v694
    %v696 = vpop.f32.mrf.mxu0
    %697 = vdwg.mxu0
    %s698 = scalar_lea.vmem %s5, 48
    %v699 = vld [vmem:[%s698] sm:$0xf]
    %v700 = vld [vmem:[%s698 + $0x4] sm:$0xf]
    %v701 = vld [vmem:[%s698 + $0x8] sm:$0xf]
    %v702 = vld [vmem:[%s698 + $0xc] sm:$0xf]
    %v707 = vunpack.c.l.b16 %v699
    %v708 = vunpack.c.l.b16 %v700
    %v709 = vunpack.c.l.b16 %v701
    %v710 = vunpack.c.l.b16 %v702
    %v711 = vpack.c.b16 %v708, %v707
    %v712 = vpack.c.b16 %v710, %v709
    %715 = vmatprep.subr.bf16.mxu0 0
    %716 = vmatpush1.bf16.msra.mxu0 0
    %717 = vmatprep.subr.bf16.mxu0 0
    %718 = vmatpush1.bf16.msra.mxu0 0
    %719 = vmatprep.subr.bf16.mxu0 0
    %720 = vmatpush1.bf16.msra.mxu0 0
    %721 = vmatprep.subr.bf16.mxu0 0
    %722 = vmatpush1.bf16.msra.mxu0 0
    %723 = vmatprep.subr.bf16.mxu0 0
    %724 = vmatpush1.bf16.msra.mxu0 0
    %725 = vmatprep.subr.bf16.mxu0 0
    %726 = vmatpush1.bf16.msra.mxu0 0
    %727 = vmatprep.subr.bf16.mxu0 0
    %728 = vmatpush1.bf16.msra.mxu0 %v712
    %729 = vmatprep.subr.bf16.mxu0 0
    %730 = vmatpush1.bf16.msra.mxu0 %v711
    %731 = vmatprep.subr.bf16.mxu0 0
    %732 = vmatpush2.bf16.msra.mxu0 0
    %733 = vmatprep.subr.bf16.mxu0 0
    %734 = vmatpush2.bf16.msra.mxu0 0
    %735 = vmatprep.subr.bf16.mxu0 0
    %736 = vmatpush2.bf16.msra.mxu0 0
    %737 = vmatprep.subr.bf16.mxu0 0
    %738 = vmatpush2.bf16.msra.mxu0 0
    %739 = vmatprep.subr.bf16.mxu0 0
    %740 = vmatpush2.bf16.msra.mxu0 0
    %741 = vmatprep.subr.bf16.mxu0 0
    %742 = vmatpush2.bf16.msra.mxu0 0
    %743 = vmatprep.subr.bf16.mxu0 0
    %744 = vmatpush2.bf16.msra.mxu0 0
    %745 = vmatprep.subr.bf16.mxu0 0
    %746 = vmatpush2.bf16.msra.mxu0 0
    %747 = vmatprep.mubr.bf16.mxu0 0
    %748 = vmatmul.mubr.bf16.gmra.mxu0 %v191
    %v749 = vpop.f32.mrf.mxu0
    %v750 = vadd.f32 0.0, %v749
    %v751 = vpop.f32.mrf.mxu0
    %v752 = vpop.f32.mrf.mxu0
    %v753 = vadd.f32 0.0, %v752
    %v754 = vpop.f32.mrf.mxu0
    %755 = vdwg.mxu0
    %v756 = vpack.c.bf16 %v98, %v98
    %v757 = vpack.c.bf16 %v163, %v163
    %v758 = vpack.c.bf16 %v228, %v228
    %vm759 = vcmask 64512
    %v761 = vsel %vm759, %v756, 0
    %v764 = vsel %vm759, %v757, 0
    %766 = vmatprep.subr.bf16.mxu0 0
    %767 = vmatpush1.bf16.xpose.msra.mxu0 0
    %768 = vmatprep.subr.bf16.mxu0 0
    %769 = vmatpush1.bf16.xpose.msra.mxu0 0
    %770 = vmatprep.subr.bf16.mxu0 0
    %771 = vmatpush1.bf16.xpose.msra.mxu0 0
    %772 = vmatprep.subr.bf16.mxu0 0
    %773 = vmatpush1.bf16.xpose.msra.mxu0 0
    %774 = vmatprep.subr.bf16.mxu0 0
    %775 = vmatpush1.bf16.xpose.msra.mxu0 0
    %776 = vmatprep.subr.bf16.mxu0 0
    %777 = vmatpush1.bf16.xpose.msra.mxu0 0
    %778 = vmatprep.subr.bf16.mxu0 0
    %779 = vmatpush1.bf16.xpose.msra.mxu0 0
    %780 = vmatprep.subr.bf16.mxu0 0
    %781 = vmatpush1.bf16.xpose.msra.mxu0 %v764
    %782 = vmatprep.subr.bf16.mxu0 0
    %783 = vmatpush2.bf16.xpose.msra.mxu0 0
    %784 = vmatprep.subr.bf16.mxu0 0
    %785 = vmatpush2.bf16.xpose.msra.mxu0 0
    %786 = vmatprep.subr.bf16.mxu0 0
    %787 = vmatpush2.bf16.xpose.msra.mxu0 0
    %788 = vmatprep.subr.bf16.mxu0 0
    %789 = vmatpush2.bf16.xpose.msra.mxu0 0
    %790 = vmatprep.subr.bf16.mxu0 0
    %791 = vmatpush2.bf16.xpose.msra.mxu0 0
    %792 = vmatprep.subr.bf16.mxu0 0
    %793 = vmatpush2.bf16.xpose.msra.mxu0 0
    %794 = vmatprep.subr.bf16.mxu0 0
    %795 = vmatpush2.bf16.xpose.msra.mxu0 0
    %796 = vmatprep.subr.bf16.mxu0 0
    %797 = vmatpush2.bf16.xpose.msra.mxu0 0
    %798 = vmatprep.mubr.bf16.mxu0 0
    %799 = vmatmul.mubr.bf16.gmra.mxu0 %v761
    %v800 = vpop.f32.mrf.mxu0
    %v801 = vadd.f32 0.0, %v800
    %v802 = vpop.f32.mrf.mxu0
    %v803 = vpop.f32.mrf.mxu0
    %v804 = vpop.f32.mrf.mxu0
    %805 = vdwg.mxu0
    %v806 = vsel %vm759, %v801, -inf
    %807 = vmax.xlane.f32.xlu0 %v806
    %v808 = vpop.xlane.xlu0 %807
    %v809 = vsub.f32 %v801, %v808
    %v810 = vmul.f32 %v809, 1.442695
    %v811 = vpow.pop %v810
    %v812 = vpack.c.bf16 %v811, %v811
    %v814 = vsel %vm759, %v812, 0
    %vm816 = vcmask 1043456
    %v818 = vsel %vm816, %v758, 0
    %820 = vmatprep.subr.bf16.mxu0 0
    %821 = vmatpush1.bf16.msra.mxu0 0
    %822 = vmatprep.subr.bf16.mxu0 0
    %823 = vmatpush1.bf16.msra.mxu0 0
    %824 = vmatprep.subr.bf16.mxu0 0
    %825 = vmatpush1.bf16.msra.mxu0 0
    %826 = vmatprep.subr.bf16.mxu0 0
    %827 = vmatpush1.bf16.msra.mxu0 0
    %828 = vmatprep.subr.bf16.mxu0 0
    %829 = vmatpush1.bf16.msra.mxu0 0
    %830 = vmatprep.subr.bf16.mxu0 0
    %831 = vmatpush1.bf16.msra.mxu0 0
    %832 = vmatprep.subr.bf16.mxu0 0
    %833 = vmatpush1.bf16.msra.mxu0 0
    %834 = vmatprep.subr.bf16.mxu0 0
    %835 = vmatpush1.bf16.msra.mxu0 %v818
    %836 = vmatprep.subr.bf16.mxu0 0
    %837 = vmatpush2.bf16.msra.mxu0 0
    %838 = vmatprep.subr.bf16.mxu0 0
    %839 = vmatpush2.bf16.msra.mxu0 0
    %840 = vmatprep.subr.bf16.mxu0 0
    %841 = vmatpush2.bf16.msra.mxu0 0
    %842 = vmatprep.subr.bf16.mxu0 0
    %843 = vmatpush2.bf16.msra.mxu0 0
    %844 = vmatprep.subr.bf16.mxu0 0
    %845 = vmatpush2.bf16.msra.mxu0 0
    %846 = vmatprep.subr.bf16.mxu0 0
    %847 = vmatpush2.bf16.msra.mxu0 0
    %848 = vmatprep.subr.bf16.mxu0 0
    %849 = vmatpush2.bf16.msra.mxu0 0
    %850 = vmatprep.subr.bf16.mxu0 0
    %851 = vmatpush2.bf16.msra.mxu0 0
    %852 = vmatprep.mubr.bf16.mxu0 0
    %853 = vmatmul.mubr.bf16.gmra.mxu0 %v814
    %v854 = vpop.f32.mrf.mxu0
    %v855 = vadd.f32 0.0, %v854
    %v856 = vpop.f32.mrf.mxu0
    %v857 = vpop.f32.mrf.mxu0
    %v858 = vpop.f32.mrf.mxu0
    %859 = vdwg.mxu0
    %v860 = vsel %vm759, %v811, 0.0
    %861 = vadd.xlane.f32.xlu0 %v860
    %v862 = vpop.xlane.xlu0 %861
    %v863 = vrcp.pop %v862
    %v864 = vmul.f32 %v855, %v863
    %v865 = vpack.c.bf16 %v864, %v864
    %v866 = vld [vmem:[%s6] sm:$0xf]
    %v867 = vpack.c.bf16 %v286, %v286
    %v868 = vpack.c.bf16 %v344, %v344
    %v869 = vpack.c.bf16 %v402, %v402
    %v871 = vsel %vm759, %v867, 0
    %v874 = vsel %vm759, %v868, 0
    %876 = vmatprep.subr.bf16.mxu0 0
    %877 = vmatpush1.bf16.xpose.msra.mxu0 0
    %878 = vmatprep.subr.bf16.mxu0 0
    %879 = vmatpush1.bf16.xpose.msra.mxu0 0
    %880 = vmatprep.subr.bf16.mxu0 0
    %881 = vmatpush1.bf16.xpose.msra.mxu0 0
    %882 = vmatprep.subr.bf16.mxu0 0
    %883 = vmatpush1.bf16.xpose.msra.mxu0 0
    %884 = vmatprep.subr.bf16.mxu0 0
    %885 = vmatpush1.bf16.xpose.msra.mxu0 0
    %886 = vmatprep.subr.bf16.mxu0 0
    %887 = vmatpush1.bf16.xpose.msra.mxu0 0
    %888 = vmatprep.subr.bf16.mxu0 0
    %889 = vmatpush1.bf16.xpose.msra.mxu0 0
    %890 = vmatprep.subr.bf16.mxu0 0
    %891 = vmatpush1.bf16.xpose.msra.mxu0 %v874
    %892 = vmatprep.subr.bf16.mxu0 0
    %893 = vmatpush2.bf16.xpose.msra.mxu0 0
    %894 = vmatprep.subr.bf16.mxu0 0
    %895 = vmatpush2.bf16.xpose.msra.mxu0 0
    %896 = vmatprep.subr.bf16.mxu0 0
    %897 = vmatpush2.bf16.xpose.msra.mxu0 0
    %898 = vmatprep.subr.bf16.mxu0 0
    %899 = vmatpush2.bf16.xpose.msra.mxu0 0
    %900 = vmatprep.subr.bf16.mxu0 0
    %901 = vmatpush2.bf16.xpose.msra.mxu0 0
    %902 = vmatprep.subr.bf16.mxu0 0
    %903 = vmatpush2.bf16.xpose.msra.mxu0 0
    %904 = vmatprep.subr.bf16.mxu0 0
    %905 = vmatpush2.bf16.xpose.msra.mxu0 0
    %906 = vmatprep.subr.bf16.mxu0 0
    %907 = vmatpush2.bf16.xpose.msra.mxu0 0
    %908 = vmatprep.mubr.bf16.mxu0 0
    %909 = vmatmul.mubr.bf16.gmra.mxu0 %v871
    %v910 = vpop.f32.mrf.mxu0
    %v911 = vadd.f32 0.0, %v910
    %v912 = vpop.f32.mrf.mxu0
    %v913 = vpop.f32.mrf.mxu0
    %v914 = vpop.f32.mrf.mxu0
    %915 = vdwg.mxu0
    %v916 = vsel %vm759, %v911, -inf
    %917 = vmax.xlane.f32.xlu0 %v916
    %v918 = vpop.xlane.xlu0 %917
    %v919 = vsub.f32 %v911, %v918
    %v920 = vmul.f32 %v919, 1.442695
    %v921 = vpow.pop %v920
    %v922 = vpack.c.bf16 %v921, %v921
    %v924 = vsel %vm759, %v922, 0
    %v927 = vsel %vm816, %v869, 0
    %929 = vmatprep.subr.bf16.mxu0 0
    %930 = vmatpush1.bf16.msra.mxu0 0
    %931 = vmatprep.subr.bf16.mxu0 0
    %932 = vmatpush1.bf16.msra.mxu0 0
    %933 = vmatprep.subr.bf16.mxu0 0
    %934 = vmatpush1.bf16.msra.mxu0 0
    %935 = vmatprep.subr.bf16.mxu0 0
    %936 = vmatpush1.bf16.msra.mxu0 0
    %937 = vmatprep.subr.bf16.mxu0 0
    %938 = vmatpush1.bf16.msra.mxu0 0
    %939 = vmatprep.subr.bf16.mxu0 0
    %940 = vmatpush1.bf16.msra.mxu0 0
    %941 = vmatprep.subr.bf16.mxu0 0
    %942 = vmatpush1.bf16.msra.mxu0 0
    %943 = vmatprep.subr.bf16.mxu0 0
    %944 = vmatpush1.bf16.msra.mxu0 %v927
    %945 = vmatprep.subr.bf16.mxu0 0
    %946 = vmatpush2.bf16.msra.mxu0 0
    %947 = vmatprep.subr.bf16.mxu0 0
    %948 = vmatpush2.bf16.msra.mxu0 0
    %949 = vmatprep.subr.bf16.mxu0 0
    %950 = vmatpush2.bf16.msra.mxu0 0
    %951 = vmatprep.subr.bf16.mxu0 0
    %952 = vmatpush2.bf16.msra.mxu0 0
    %953 = vmatprep.subr.bf16.mxu0 0
    %954 = vmatpush2.bf16.msra.mxu0 0
    %955 = vmatprep.subr.bf16.mxu0 0
    %956 = vmatpush2.bf16.msra.mxu0 0
    %957 = vmatprep.subr.bf16.mxu0 0
    %958 = vmatpush2.bf16.msra.mxu0 0
    %959 = vmatprep.subr.bf16.mxu0 0
    %960 = vmatpush2.bf16.msra.mxu0 0
    %961 = vmatprep.mubr.bf16.mxu0 0
    %962 = vmatmul.mubr.bf16.gmra.mxu0 %v924
    %v963 = vpop.f32.mrf.mxu0
    %v964 = vadd.f32 0.0, %v963
    %v965 = vpop.f32.mrf.mxu0
    %v966 = vpop.f32.mrf.mxu0
    %v967 = vpop.f32.mrf.mxu0
    %968 = vdwg.mxu0
    %v969 = vsel %vm759, %v921, 0.0
    %970 = vadd.xlane.f32.xlu0 %v969
    %v971 = vpop.xlane.xlu0 %970
    %v972 = vrcp.pop %v971
    %v973 = vmul.f32 %v964, %v972
    %v974 = vpack.c.bf16 %v973, %v973
    %s975 = scalar_lea.vmem %s6, 4
    %v976 = vld [vmem:[%s975] sm:$0xf]
    %v978 = vsel %vm759, %v974, 0
    %v981 = vsel %vm816, %v976, 0
    %983 = vmatprep.subr.bf16.mxu0 0
    %984 = vmatpush1.bf16.msra.mxu0 0
    %985 = vmatprep.subr.bf16.mxu0 0
    %986 = vmatpush1.bf16.msra.mxu0 0
    %987 = vmatprep.subr.bf16.mxu0 0
    %988 = vmatpush1.bf16.msra.mxu0 0
    %989 = vmatprep.subr.bf16.mxu0 0
    %990 = vmatpush1.bf16.msra.mxu0 0
    %991 = vmatprep.subr.bf16.mxu0 0
    %992 = vmatpush1.bf16.msra.mxu0 0
    %993 = vmatprep.subr.bf16.mxu0 0
    %994 = vmatpush1.bf16.msra.mxu0 0
    %995 = vmatprep.subr.bf16.mxu0 0
    %996 = vmatpush1.bf16.msra.mxu0 0
    %997 = vmatprep.subr.bf16.mxu0 0
    %998 = vmatpush1.bf16.msra.mxu0 %v981
    %999 = vmatprep.subr.bf16.mxu0 0
    %1000 = vmatpush2.bf16.msra.mxu0 0
    %1001 = vmatprep.subr.bf16.mxu0 0
    %1002 = vmatpush2.bf16.msra.mxu0 0
    %1003 = vmatprep.subr.bf16.mxu0 0
    %1004 = vmatpush2.bf16.msra.mxu0 0
    %1005 = vmatprep.subr.bf16.mxu0 0
    %1006 = vmatpush2.bf16.msra.mxu0 0
    %1007 = vmatprep.subr.bf16.mxu0 0
    %1008 = vmatpush2.bf16.msra.mxu0 0
    %1009 = vmatprep.subr.bf16.mxu0 0
    %1010 = vmatpush2.bf16.msra.mxu0 0
    %1011 = vmatprep.subr.bf16.mxu0 0
    %1012 = vmatpush2.bf16.msra.mxu0 0
    %1013 = vmatprep.subr.bf16.mxu0 0
    %1014 = vmatpush2.bf16.msra.mxu0 0
    %1015 = vmatprep.mubr.bf16.mxu0 0
    %1016 = vmatmul.mubr.bf16.gmra.mxu0 %v978
    %v1017 = vpop.f32.mrf.mxu0
    %v1018 = vadd.f32 0.0, %v1017
    %v1019 = vpop.f32.mrf.mxu0
    %v1020 = vpop.f32.mrf.mxu0
    %v1021 = vpop.f32.mrf.mxu0
    %1022 = vdwg.mxu0
    %v1024 = vsel %vm759, %v865, 0
    %v1027 = vsel %vm816, %v866, 0
    %1029 = vmatprep.subr.bf16.mxu0 0
    %1030 = vmatpush1.bf16.msra.mxu0 0
    %1031 = vmatprep.subr.bf16.mxu0 0
    %1032 = vmatpush1.bf16.msra.mxu0 0
    %1033 = vmatprep.subr.bf16.mxu0 0
    %1034 = vmatpush1.bf16.msra.mxu0 0
    %1035 = vmatprep.subr.bf16.mxu0 0
    %1036 = vmatpush1.bf16.msra.mxu0 0
    %1037 = vmatprep.subr.bf16.mxu0 0
    %1038 = vmatpush1.bf16.msra.mxu0 0
    %1039 = vmatprep.subr.bf16.mxu0 0
    %1040 = vmatpush1.bf16.msra.mxu0 0
    %1041 = vmatprep.subr.bf16.mxu0 0
    %1042 = vmatpush1.bf16.msra.mxu0 0
    %1043 = vmatprep.subr.bf16.mxu0 0
    %1044 = vmatpush1.bf16.msra.mxu0 %v1027
    %1045 = vmatprep.subr.bf16.mxu0 0
    %1046 = vmatpush2.bf16.msra.mxu0 0
    %1047 = vmatprep.subr.bf16.mxu0 0
    %1048 = vmatpush2.bf16.msra.mxu0 0
    %1049 = vmatprep.subr.bf16.mxu0 0
    %1050 = vmatpush2.bf16.msra.mxu0 0
    %1051 = vmatprep.subr.bf16.mxu0 0
    %1052 = vmatpush2.bf16.msra.mxu0 0
    %1053 = vmatprep.subr.bf16.mxu0 0
    %1054 = vmatpush2.bf16.msra.mxu0 0
    %1055 = vmatprep.subr.bf16.mxu0 0
    %1056 = vmatpush2.bf16.msra.mxu0 0
    %1057 = vmatprep.subr.bf16.mxu0 0
    %1058 = vmatpush2.bf16.msra.mxu0 0
    %1059 = vmatprep.subr.bf16.mxu0 0
    %1060 = vmatpush2.bf16.msra.mxu0 0
    %1061 = vmatprep.mubr.bf16.mxu0 0
    %1062 = vmatmul.mubr.bf16.gmra.mxu0 %v1024
    %v1063 = vpop.f32.mrf.mxu0
    %v1064 = vadd.f32 %v1018, %v1063
    %v1065 = vpop.f32.mrf.mxu0
    %v1066 = vpop.f32.mrf.mxu0
    %v1067 = vpop.f32.mrf.mxu0
    %1068 = vdwg.mxu0
    %v1069 = vpack.c.bf16 %v460, %v460
    %v1070 = vpack.c.bf16 %v518, %v518
    %v1071 = vpack.c.bf16 %v576, %v576
    %v1073 = vsel %vm759, %v1069, 0
    %v1076 = vsel %vm759, %v1070, 0
    %1078 = vmatprep.subr.bf16.mxu0 0
    %1079 = vmatpush1.bf16.xpose.msra.mxu0 0
    %1080 = vmatprep.subr.bf16.mxu0 0
    %1081 = vmatpush1.bf16.xpose.msra.mxu0 0
    %1082 = vmatprep.subr.bf16.mxu0 0
    %1083 = vmatpush1.bf16.xpose.msra.mxu0 0
    %1084 = vmatprep.subr.bf16.mxu0 0
    %1085 = vmatpush1.bf16.xpose.msra.mxu0 0
    %1086 = vmatprep.subr.bf16.mxu0 0
    %1087 = vmatpush1.bf16.xpose.msra.mxu0 0
    %1088 = vmatprep.subr.bf16.mxu0 0
    %1089 = vmatpush1.bf16.xpose.msra.mxu0 0
    %1090 = vmatprep.subr.bf16.mxu0 0
    %1091 = vmatpush1.bf16.xpose.msra.mxu0 0
    %1092 = vmatprep.subr.bf16.mxu0 0
    %1093 = vmatpush1.bf16.xpose.msra.mxu0 %v1076
    %1094 = vmatprep.subr.bf16.mxu0 0
    %1095 = vmatpush2.bf16.xpose.msra.mxu0 0
    %1096 = vmatprep.subr.bf16.mxu0 0
    %1097 = vmatpush2.bf16.xpose.msra.mxu0 0
    %1098 = vmatprep.subr.bf16.mxu0 0
    %1099 = vmatpush2.bf16.xpose.msra.mxu0 0
    %1100 = vmatprep.subr.bf16.mxu0 0
    %1101 = vmatpush2.bf16.xpose.msra.mxu0 0
    %1102 = vmatprep.subr.bf16.mxu0 0
    %1103 = vmatpush2.bf16.xpose.msra.mxu0 0
    %1104 = vmatprep.subr.bf16.mxu0 0
    %1105 = vmatpush2.bf16.xpose.msra.mxu0 0
    %1106 = vmatprep.subr.bf16.mxu0 0
    %1107 = vmatpush2.bf16.xpose.msra.mxu0 0
    %1108 = vmatprep.subr.bf16.mxu0 0
    %1109 = vmatpush2.bf16.xpose.msra.mxu0 0
    %1110 = vmatprep.mubr.bf16.mxu0 0
    %1111 = vmatmul.mubr.bf16.gmra.mxu0 %v1073
    %v1112 = vpop.f32.mrf.mxu0
    %v1113 = vadd.f32 0.0, %v1112
    %v1114 = vpop.f32.mrf.mxu0
    %v1115 = vpop.f32.mrf.mxu0
    %v1116 = vpop.f32.mrf.mxu0
    %1117 = vdwg.mxu0
    %v1118 = vsel %vm759, %v1113, -inf
    %1119 = vmax.xlane.f32.xlu0 %v1118
    %v1120 = vpop.xlane.xlu0 %1119
    %v1121 = vsub.f32 %v1113, %v1120
    %v1122 = vmul.f32 %v1121, 1.442695
    %v1123 = vpow.pop %v1122
    %v1124 = vpack.c.bf16 %v1123, %v1123
    %v1126 = vsel %vm759, %v1124, 0
    %v1129 = vsel %vm816, %v1071, 0
    %1131 = vmatprep.subr.bf16.mxu0 0
    %1132 = vmatpush1.bf16.msra.mxu0 0
    %1133 = vmatprep.subr.bf16.mxu0 0
    %1134 = vmatpush1.bf16.msra.mxu0 0
    %1135 = vmatprep.subr.bf16.mxu0 0
    %1136 = vmatpush1.bf16.msra.mxu0 0
    %1137 = vmatprep.subr.bf16.mxu0 0
    %1138 = vmatpush1.bf16.msra.mxu0 0
    %1139 = vmatprep.subr.bf16.mxu0 0
    %1140 = vmatpush1.bf16.msra.mxu0 0
    %1141 = vmatprep.subr.bf16.mxu0 0
    %1142 = vmatpush1.bf16.msra.mxu0 0
    %1143 = vmatprep.subr.bf16.mxu0 0
    %1144 = vmatpush1.bf16.msra.mxu0 0
    %1145 = vmatprep.subr.bf16.mxu0 0
    %1146 = vmatpush1.bf16.msra.mxu0 %v1129
    %1147 = vmatprep.subr.bf16.mxu0 0
    %1148 = vmatpush2.bf16.msra.mxu0 0
    %1149 = vmatprep.subr.bf16.mxu0 0
    %1150 = vmatpush2.bf16.msra.mxu0 0
    %1151 = vmatprep.subr.bf16.mxu0 0
    %1152 = vmatpush2.bf16.msra.mxu0 0
    %1153 = vmatprep.subr.bf16.mxu0 0
    %1154 = vmatpush2.bf16.msra.mxu0 0
    %1155 = vmatprep.subr.bf16.mxu0 0
    %1156 = vmatpush2.bf16.msra.mxu0 0
    %1157 = vmatprep.subr.bf16.mxu0 0
    %1158 = vmatpush2.bf16.msra.mxu0 0
    %1159 = vmatprep.subr.bf16.mxu0 0
    %1160 = vmatpush2.bf16.msra.mxu0 0
    %1161 = vmatprep.subr.bf16.mxu0 0
    %1162 = vmatpush2.bf16.msra.mxu0 0
    %1163 = vmatprep.mubr.bf16.mxu0 0
    %1164 = vmatmul.mubr.bf16.gmra.mxu0 %v1126
    %v1165 = vpop.f32.mrf.mxu0
    %v1166 = vadd.f32 0.0, %v1165
    %v1167 = vpop.f32.mrf.mxu0
    %v1168 = vpop.f32.mrf.mxu0
    %v1169 = vpop.f32.mrf.mxu0
    %1170 = vdwg.mxu0
    %v1171 = vsel %vm759, %v1123, 0.0
    %1172 = vadd.xlane.f32.xlu0 %v1171
    %v1173 = vpop.xlane.xlu0 %1172
    %v1174 = vrcp.pop %v1173
    %v1175 = vmul.f32 %v1166, %v1174
    %v1176 = vpack.c.bf16 %v1175, %v1175
    %s1177 = scalar_lea.vmem %s6, 8
    %v1178 = vld [vmem:[%s1177] sm:$0xf]
    %v1180 = vsel %vm759, %v1176, 0
    %v1183 = vsel %vm816, %v1178, 0
    %1185 = vmatprep.subr.bf16.mxu0 0
    %1186 = vmatpush1.bf16.msra.mxu0 0
    %1187 = vmatprep.subr.bf16.mxu0 0
    %1188 = vmatpush1.bf16.msra.mxu0 0
    %1189 = vmatprep.subr.bf16.mxu0 0
    %1190 = vmatpush1.bf16.msra.mxu0 0
    %1191 = vmatprep.subr.bf16.mxu0 0
    %1192 = vmatpush1.bf16.msra.mxu0 0
    %1193 = vmatprep.subr.bf16.mxu0 0
    %1194 = vmatpush1.bf16.msra.mxu0 0
    %1195 = vmatprep.subr.bf16.mxu0 0
    %1196 = vmatpush1.bf16.msra.mxu0 0
    %1197 = vmatprep.subr.bf16.mxu0 0
    %1198 = vmatpush1.bf16.msra.mxu0 0
    %1199 = vmatprep.subr.bf16.mxu0 0
    %1200 = vmatpush1.bf16.msra.mxu0 %v1183
    %1201 = vmatprep.subr.bf16.mxu0 0
    %1202 = vmatpush2.bf16.msra.mxu0 0
    %1203 = vmatprep.subr.bf16.mxu0 0
    %1204 = vmatpush2.bf16.msra.mxu0 0
    %1205 = vmatprep.subr.bf16.mxu0 0
    %1206 = vmatpush2.bf16.msra.mxu0 0
    %1207 = vmatprep.subr.bf16.mxu0 0
    %1208 = vmatpush2.bf16.msra.mxu0 0
    %1209 = vmatprep.subr.bf16.mxu0 0
    %1210 = vmatpush2.bf16.msra.mxu0 0
    %1211 = vmatprep.subr.bf16.mxu0 0
    %1212 = vmatpush2.bf16.msra.mxu0 0
    %1213 = vmatprep.subr.bf16.mxu0 0
    %1214 = vmatpush2.bf16.msra.mxu0 0
    %1215 = vmatprep.subr.bf16.mxu0 0
    %1216 = vmatpush2.bf16.msra.mxu0 0
    %1217 = vmatprep.mubr.bf16.mxu0 0
    %1218 = vmatmul.mubr.bf16.gmra.mxu0 %v1180
    %v1219 = vpop.f32.mrf.mxu0
    %v1220 = vadd.f32 0.0, %v1219
    %v1221 = vpop.f32.mrf.mxu0
    %v1222 = vpop.f32.mrf.mxu0
    %v1223 = vpop.f32.mrf.mxu0
    %1224 = vdwg.mxu0
    %v1225 = vadd.f32 %v1064, %v1220
    %v1226 = vpack.c.bf16 %v634, %v634
    %v1227 = vpack.c.bf16 %v692, %v692
    %v1228 = vpack.c.bf16 %v750, %v750
    %v1230 = vsel %vm759, %v1226, 0
    %v1233 = vsel %vm759, %v1227, 0
    %1235 = vmatprep.subr.bf16.mxu0 0
    %1236 = vmatpush1.bf16.xpose.msra.mxu0 0
    %1237 = vmatprep.subr.bf16.mxu0 0
    %1238 = vmatpush1.bf16.xpose.msra.mxu0 0
    %1239 = vmatprep.subr.bf16.mxu0 0
    %1240 = vmatpush1.bf16.xpose.msra.mxu0 0
    %1241 = vmatprep.subr.bf16.mxu0 0
    %1242 = vmatpush1.bf16.xpose.msra.mxu0 0
    %1243 = vmatprep.subr.bf16.mxu0 0
    %1244 = vmatpush1.bf16.xpose.msra.mxu0 0
    %1245 = vmatprep.subr.bf16.mxu0 0
    %1246 = vmatpush1.bf16.xpose.msra.mxu0 0
    %1247 = vmatprep.subr.bf16.mxu0 0
    %1248 = vmatpush1.bf16.xpose.msra.mxu0 0
    %1249 = vmatprep.subr.bf16.mxu0 0
    %1250 = vmatpush1.bf16.xpose.msra.mxu0 %v1233
    %1251 = vmatprep.subr.bf16.mxu0 0
    %1252 = vmatpush2.bf16.xpose.msra.mxu0 0
    %1253 = vmatprep.subr.bf16.mxu0 0
    %1254 = vmatpush2.bf16.xpose.msra.mxu0 0
    %1255 = vmatprep.subr.bf16.mxu0 0
    %1256 = vmatpush2.bf16.xpose.msra.mxu0 0
    %1257 = vmatprep.subr.bf16.mxu0 0
    %1258 = vmatpush2.bf16.xpose.msra.mxu0 0
    %1259 = vmatprep.subr.bf16.mxu0 0
    %1260 = vmatpush2.bf16.xpose.msra.mxu0 0
    %1261 = vmatprep.subr.bf16.mxu0 0
    %1262 = vmatpush2.bf16.xpose.msra.mxu0 0
    %1263 = vmatprep.subr.bf16.mxu0 0
    %1264 = vmatpush2.bf16.xpose.msra.mxu0 0
    %1265 = vmatprep.subr.bf16.mxu0 0
    %1266 = vmatpush2.bf16.xpose.msra.mxu0 0
    %1267 = vmatprep.mubr.bf16.mxu0 0
    %1268 = vmatmul.mubr.bf16.gmra.mxu0 %v1230
    %v1269 = vpop.f32.mrf.mxu0
    %v1270 = vadd.f32 0.0, %v1269
    %v1271 = vpop.f32.mrf.mxu0
    %v1272 = vpop.f32.mrf.mxu0
    %v1273 = vpop.f32.mrf.mxu0
    %1274 = vdwg.mxu0
    %v1275 = vsel %vm759, %v1270, -inf
    %1276 = vmax.xlane.f32.xlu0 %v1275
    %v1277 = vpop.xlane.xlu0 %1276
    %v1278 = vsub.f32 %v1270, %v1277
    %v1279 = vmul.f32 %v1278, 1.442695
    %v1280 = vpow.pop %v1279
    %v1281 = vpack.c.bf16 %v1280, %v1280
    %v1283 = vsel %vm759, %v1281, 0
    %v1286 = vsel %vm816, %v1228, 0
    %1288 = vmatprep.subr.bf16.mxu0 0
    %1289 = vmatpush1.bf16.msra.mxu0 0
    %1290 = vmatprep.subr.bf16.mxu0 0
    %1291 = vmatpush1.bf16.msra.mxu0 0
    %1292 = vmatprep.subr.bf16.mxu0 0
    %1293 = vmatpush1.bf16.msra.mxu0 0
    %1294 = vmatprep.subr.bf16.mxu0 0
    %1295 = vmatpush1.bf16.msra.mxu0 0
    %1296 = vmatprep.subr.bf16.mxu0 0
    %1297 = vmatpush1.bf16.msra.mxu0 0
    %1298 = vmatprep.subr.bf16.mxu0 0
    %1299 = vmatpush1.bf16.msra.mxu0 0
    %1300 = vmatprep.subr.bf16.mxu0 0
    %1301 = vmatpush1.bf16.msra.mxu0 0
    %1302 = vmatprep.subr.bf16.mxu0 0
    %1303 = vmatpush1.bf16.msra.mxu0 %v1286
    %1304 = vmatprep.subr.bf16.mxu0 0
    %1305 = vmatpush2.bf16.msra.mxu0 0
    %1306 = vmatprep.subr.bf16.mxu0 0
    %1307 = vmatpush2.bf16.msra.mxu0 0
    %1308 = vmatprep.subr.bf16.mxu0 0
    %1309 = vmatpush2.bf16.msra.mxu0 0
    %1310 = vmatprep.subr.bf16.mxu0 0
    %1311 = vmatpush2.bf16.msra.mxu0 0
    %1312 = vmatprep.subr.bf16.mxu0 0
    %1313 = vmatpush2.bf16.msra.mxu0 0
    %1314 = vmatprep.subr.bf16.mxu0 0
    %1315 = vmatpush2.bf16.msra.mxu0 0
    %1316 = vmatprep.subr.bf16.mxu0 0
    %1317 = vmatpush2.bf16.msra.mxu0 0
    %1318 = vmatprep.subr.bf16.mxu0 0
    %1319 = vmatpush2.bf16.msra.mxu0 0
    %1320 = vmatprep.mubr.bf16.mxu0 0
    %1321 = vmatmul.mubr.bf16.gmra.mxu0 %v1283
    %v1322 = vpop.f32.mrf.mxu0
    %v1323 = vadd.f32 0.0, %v1322
    %v1324 = vpop.f32.mrf.mxu0
    %v1325 = vpop.f32.mrf.mxu0
    %v1326 = vpop.f32.mrf.mxu0
    %1327 = vdwg.mxu0
    %v1328 = vsel %vm759, %v1280, 0.0
    %1329 = vadd.xlane.f32.xlu0 %v1328
    %v1330 = vpop.xlane.xlu0 %1329
    %v1331 = vrcp.pop %v1330
    %v1332 = vmul.f32 %v1323, %v1331
    %v1333 = vpack.c.bf16 %v1332, %v1332
    %s1334 = scalar_lea.vmem %s6, 12
    %v1335 = vld [vmem:[%s1334] sm:$0xf]
    %v1337 = vsel %vm759, %v1333, 0
    %v1340 = vsel %vm816, %v1335, 0
    %1342 = vmatprep.subr.bf16.mxu0 0
    %1343 = vmatpush1.bf16.msra.mxu0 0
    %1344 = vmatprep.subr.bf16.mxu0 0
    %1345 = vmatpush1.bf16.msra.mxu0 0
    %1346 = vmatprep.subr.bf16.mxu0 0
    %1347 = vmatpush1.bf16.msra.mxu0 0
    %1348 = vmatprep.subr.bf16.mxu0 0
    %1349 = vmatpush1.bf16.msra.mxu0 0
    %1350 = vmatprep.subr.bf16.mxu0 0
    %1351 = vmatpush1.bf16.msra.mxu0 0
    %1352 = vmatprep.subr.bf16.mxu0 0
    %1353 = vmatpush1.bf16.msra.mxu0 0
    %1354 = vmatprep.subr.bf16.mxu0 0
    %1355 = vmatpush1.bf16.msra.mxu0 0
    %1356 = vmatprep.subr.bf16.mxu0 0
    %1357 = vmatpush1.bf16.msra.mxu0 %v1340
    %1358 = vmatprep.subr.bf16.mxu0 0
    %1359 = vmatpush2.bf16.msra.mxu0 0
    %1360 = vmatprep.subr.bf16.mxu0 0
    %1361 = vmatpush2.bf16.msra.mxu0 0
    %1362 = vmatprep.subr.bf16.mxu0 0
    %1363 = vmatpush2.bf16.msra.mxu0 0
    %1364 = vmatprep.subr.bf16.mxu0 0
    %1365 = vmatpush2.bf16.msra.mxu0 0
    %1366 = vmatprep.subr.bf16.mxu0 0
    %1367 = vmatpush2.bf16.msra.mxu0 0
    %1368 = vmatprep.subr.bf16.mxu0 0
    %1369 = vmatpush2.bf16.msra.mxu0 0
    %1370 = vmatprep.subr.bf16.mxu0 0
    %1371 = vmatpush2.bf16.msra.mxu0 0
    %1372 = vmatprep.subr.bf16.mxu0 0
    %1373 = vmatpush2.bf16.msra.mxu0 0
    %1374 = vmatprep.mubr.bf16.mxu0 0
    %1375 = vmatmul.mubr.bf16.gmra.mxu0 %v1337
    %v1376 = vpop.f32.mrf.mxu0
    %v1377 = vadd.f32 0.0, %v1376
    %v1378 = vpop.f32.mrf.mxu0
    %v1379 = vpop.f32.mrf.mxu0
    %v1380 = vpop.f32.mrf.mxu0
    %1381 = vdwg.mxu0
    %v1382 = vadd.f32 %v1225, %v1377
    %v1384 = vlaneseq
    %v1385 = vshrl.u32 %v1384, 7
    %v1386 = vsub.s32 0, %v1385
    %v1387 = vrot.slane %v37, %v1386
    %v1389 = vadd.f32 %v1382, %v1387
    %1390 = vst.msk [vmem:[#allocation2] sm:$0xff] %vm59, %v1389
    %v1391 = vpack.c.bf16 %v101, %v101
    %v1392 = vpack.c.bf16 %v166, %v166
    %v1393 = vpack.c.bf16 %v231, %v231
    %v1395 = vsel %vm759, %v1391, 0
    %v1398 = vsel %vm759, %v1392, 0
    %1400 = vmatprep.subr.bf16.mxu0 0
    %1401 = vmatpush1.bf16.xpose.msra.mxu0 0
    %1402 = vmatprep.subr.bf16.mxu0 0
    %1403 = vmatpush1.bf16.xpose.msra.mxu0 0
    %1404 = vmatprep.subr.bf16.mxu0 0
    %1405 = vmatpush1.bf16.xpose.msra.mxu0 0
    %1406 = vmatprep.subr.bf16.mxu0 0
    %1407 = vmatpush1.bf16.xpose.msra.mxu0 0
    %1408 = vmatprep.subr.bf16.mxu0 0
    %1409 = vmatpush1.bf16.xpose.msra.mxu0 0
    %1410 = vmatprep.subr.bf16.mxu0 0
    %1411 = vmatpush1.bf16.xpose.msra.mxu0 0
    %1412 = vmatprep.subr.bf16.mxu0 0
    %1413 = vmatpush1.bf16.xpose.msra.mxu0 0
    %1414 = vmatprep.subr.bf16.mxu0 0
    %1415 = vmatpush1.bf16.xpose.msra.mxu0 %v1398
    %1416 = vmatprep.subr.bf16.mxu0 0
    %1417 = vmatpush2.bf16.xpose.msra.mxu0 0
    %1418 = vmatprep.subr.bf16.mxu0 0
    %1419 = vmatpush2.bf16.xpose.msra.mxu0 0
    %1420 = vmatprep.subr.bf16.mxu0 0
    %1421 = vmatpush2.bf16.xpose.msra.mxu0 0
    %1422 = vmatprep.subr.bf16.mxu0 0
    %1423 = vmatpush2.bf16.xpose.msra.mxu0 0
    %1424 = vmatprep.subr.bf16.mxu0 0
    %1425 = vmatpush2.bf16.xpose.msra.mxu0 0
    %1426 = vmatprep.subr.bf16.mxu0 0
    %1427 = vmatpush2.bf16.xpose.msra.mxu0 0
    %1428 = vmatprep.subr.bf16.mxu0 0
    %1429 = vmatpush2.bf16.xpose.msra.mxu0 0
    %1430 = vmatprep.subr.bf16.mxu0 0
    %1431 = vmatpush2.bf16.xpose.msra.mxu0 0
    %1432 = vmatprep.mubr.bf16.mxu0 0
    %1433 = vmatmul.mubr.bf16.gmra.mxu0 %v1395
    %v1434 = vpop.f32.mrf.mxu0
    %v1435 = vadd.f32 0.0, %v1434
    %v1436 = vpop.f32.mrf.mxu0
    %v1437 = vpop.f32.mrf.mxu0
    %v1438 = vpop.f32.mrf.mxu0
    %1439 = vdwg.mxu0
    %v1440 = vsel %vm759, %v1435, -inf
    %1441 = vmax.xlane.f32.xlu0 %v1440
    %v1442 = vpop.xlane.xlu0 %1441
    %v1443 = vsub.f32 %v1435, %v1442
    %v1444 = vmul.f32 %v1443, 1.442695
    %v1445 = vpow.pop %v1444
    %v1446 = vpack.c.bf16 %v1445, %v1445
    %v1448 = vsel %vm759, %v1446, 0
    %v1451 = vsel %vm816, %v1393, 0
    %1453 = vmatprep.subr.bf16.mxu0 0
    %1454 = vmatpush1.bf16.msra.mxu0 0
    %1455 = vmatprep.subr.bf16.mxu0 0
    %1456 = vmatpush1.bf16.msra.mxu0 0
    %1457 = vmatprep.subr.bf16.mxu0 0
    %1458 = vmatpush1.bf16.msra.mxu0 0
    %1459 = vmatprep.subr.bf16.mxu0 0
    %1460 = vmatpush1.bf16.msra.mxu0 0
    %1461 = vmatprep.subr.bf16.mxu0 0
    %1462 = vmatpush1.bf16.msra.mxu0 0
    %1463 = vmatprep.subr.bf16.mxu0 0
    %1464 = vmatpush1.bf16.msra.mxu0 0
    %1465 = vmatprep.subr.bf16.mxu0 0
    %1466 = vmatpush1.bf16.msra.mxu0 0
    %1467 = vmatprep.subr.bf16.mxu0 0
    %1468 = vmatpush1.bf16.msra.mxu0 %v1451
    %1469 = vmatprep.subr.bf16.mxu0 0
    %1470 = vmatpush2.bf16.msra.mxu0 0
    %1471 = vmatprep.subr.bf16.mxu0 0
    %1472 = vmatpush2.bf16.msra.mxu0 0
    %1473 = vmatprep.subr.bf16.mxu0 0
    %1474 = vmatpush2.bf16.msra.mxu0 0
    %1475 = vmatprep.subr.bf16.mxu0 0
    %1476 = vmatpush2.bf16.msra.mxu0 0
    %1477 = vmatprep.subr.bf16.mxu0 0
    %1478 = vmatpush2.bf16.msra.mxu0 0
    %1479 = vmatprep.subr.bf16.mxu0 0
    %1480 = vmatpush2.bf16.msra.mxu0 0
    %1481 = vmatprep.subr.bf16.mxu0 0
    %1482 = vmatpush2.bf16.msra.mxu0 0
    %1483 = vmatprep.subr.bf16.mxu0 0
    %1484 = vmatpush2.bf16.msra.mxu0 0
    %1485 = vmatprep.mubr.bf16.mxu0 0
    %1486 = vmatmul.mubr.bf16.gmra.mxu0 %v1448
    %v1487 = vpop.f32.mrf.mxu0
    %v1488 = vadd.f32 0.0, %v1487
    %v1489 = vpop.f32.mrf.mxu0
    %v1490 = vpop.f32.mrf.mxu0
    %v1491 = vpop.f32.mrf.mxu0
    %1492 = vdwg.mxu0
    %v1493 = vsel %vm759, %v1445, 0.0
    %1494 = vadd.xlane.f32.xlu0 %v1493
    %v1495 = vpop.xlane.xlu0 %1494
    %v1496 = vrcp.pop %v1495
    %v1497 = vmul.f32 %v1488, %v1496
    %v1498 = vpack.c.bf16 %v1497, %v1497
    %v1499 = vld [vmem:[%s6] sm:$0xf]
    %v1500 = vpack.c.bf16 %v289, %v289
    %v1501 = vpack.c.bf16 %v347, %v347
    %v1502 = vpack.c.bf16 %v405, %v405
    %v1504 = vsel %vm759, %v1500, 0
    %v1507 = vsel %vm759, %v1501, 0
    %1509 = vmatprep.subr.bf16.mxu0 0
    %1510 = vmatpush1.bf16.xpose.msra.mxu0 0
    %1511 = vmatprep.subr.bf16.mxu0 0
    %1512 = vmatpush1.bf16.xpose.msra.mxu0 0
    %1513 = vmatprep.subr.bf16.mxu0 0
    %1514 = vmatpush1.bf16.xpose.msra.mxu0 0
    %1515 = vmatprep.subr.bf16.mxu0 0
    %1516 = vmatpush1.bf16.xpose.msra.mxu0 0
    %1517 = vmatprep.subr.bf16.mxu0 0
    %1518 = vmatpush1.bf16.xpose.msra.mxu0 0
    %1519 = vmatprep.subr.bf16.mxu0 0
    %1520 = vmatpush1.bf16.xpose.msra.mxu0 0
    %1521 = vmatprep.subr.bf16.mxu0 0
    %1522 = vmatpush1.bf16.xpose.msra.mxu0 0
    %1523 = vmatprep.subr.bf16.mxu0 0
    %1524 = vmatpush1.bf16.xpose.msra.mxu0 %v1507
    %1525 = vmatprep.subr.bf16.mxu0 0
    %1526 = vmatpush2.bf16.xpose.msra.mxu0 0
    %1527 = vmatprep.subr.bf16.mxu0 0
    %1528 = vmatpush2.bf16.xpose.msra.mxu0 0
    %1529 = vmatprep.subr.bf16.mxu0 0
    %1530 = vmatpush2.bf16.xpose.msra.mxu0 0
    %1531 = vmatprep.subr.bf16.mxu0 0
    %1532 = vmatpush2.bf16.xpose.msra.mxu0 0
    %1533 = vmatprep.subr.bf16.mxu0 0
    %1534 = vmatpush2.bf16.xpose.msra.mxu0 0
    %1535 = vmatprep.subr.bf16.mxu0 0
    %1536 = vmatpush2.bf16.xpose.msra.mxu0 0
    %1537 = vmatprep.subr.bf16.mxu0 0
    %1538 = vmatpush2.bf16.xpose.msra.mxu0 0
    %1539 = vmatprep.subr.bf16.mxu0 0
    %1540 = vmatpush2.bf16.xpose.msra.mxu0 0
    %1541 = vmatprep.mubr.bf16.mxu0 0
    %1542 = vmatmul.mubr.bf16.gmra.mxu0 %v1504
    %v1543 = vpop.f32.mrf.mxu0
    %v1544 = vadd.f32 0.0, %v1543
    %v1545 = vpop.f32.mrf.mxu0
    %v1546 = vpop.f32.mrf.mxu0
    %v1547 = vpop.f32.mrf.mxu0
    %1548 = vdwg.mxu0
    %v1549 = vsel %vm759, %v1544, -inf
    %1550 = vmax.xlane.f32.xlu0 %v1549
    %v1551 = vpop.xlane.xlu0 %1550
    %v1552 = vsub.f32 %v1544, %v1551
    %v1553 = vmul.f32 %v1552, 1.442695
    %v1554 = vpow.pop %v1553
    %v1555 = vpack.c.bf16 %v1554, %v1554
    %v1557 = vsel %vm759, %v1555, 0
    %v1560 = vsel %vm816, %v1502, 0
    %1562 = vmatprep.subr.bf16.mxu0 0
    %1563 = vmatpush1.bf16.msra.mxu0 0
    %1564 = vmatprep.subr.bf16.mxu0 0
    %1565 = vmatpush1.bf16.msra.mxu0 0
    %1566 = vmatprep.subr.bf16.mxu0 0
    %1567 = vmatpush1.bf16.msra.mxu0 0
    %1568 = vmatprep.subr.bf16.mxu0 0
    %1569 = vmatpush1.bf16.msra.mxu0 0
    %1570 = vmatprep.subr.bf16.mxu0 0
    %1571 = vmatpush1.bf16.msra.mxu0 0
    %1572 = vmatprep.subr.bf16.mxu0 0
    %1573 = vmatpush1.bf16.msra.mxu0 0
    %1574 = vmatprep.subr.bf16.mxu0 0
    %1575 = vmatpush1.bf16.msra.mxu0 0
    %1576 = vmatprep.subr.bf16.mxu0 0
    %1577 = vmatpush1.bf16.msra.mxu0 %v1560
    %1578 = vmatprep.subr.bf16.mxu0 0
    %1579 = vmatpush2.bf16.msra.mxu0 0
    %1580 = vmatprep.subr.bf16.mxu0 0
    %1581 = vmatpush2.bf16.msra.mxu0 0
    %1582 = vmatprep.subr.bf16.mxu0 0
    %1583 = vmatpush2.bf16.msra.mxu0 0
    %1584 = vmatprep.subr.bf16.mxu0 0
    %1585 = vmatpush2.bf16.msra.mxu0 0
    %1586 = vmatprep.subr.bf16.mxu0 0
    %1587 = vmatpush2.bf16.msra.mxu0 0
    %1588 = vmatprep.subr.bf16.mxu0 0
    %1589 = vmatpush2.bf16.msra.mxu0 0
    %1590 = vmatprep.subr.bf16.mxu0 0
    %1591 = vmatpush2.bf16.msra.mxu0 0
    %1592 = vmatprep.subr.bf16.mxu0 0
    %1593 = vmatpush2.bf16.msra.mxu0 0
    %1594 = vmatprep.mubr.bf16.mxu0 0
    %1595 = vmatmul.mubr.bf16.gmra.mxu0 %v1557
    %v1596 = vpop.f32.mrf.mxu0
    %v1597 = vadd.f32 0.0, %v1596
    %v1598 = vpop.f32.mrf.mxu0
    %v1599 = vpop.f32.mrf.mxu0
    %v1600 = vpop.f32.mrf.mxu0
    %1601 = vdwg.mxu0
    %v1602 = vsel %vm759, %v1554, 0.0
    %1603 = vadd.xlane.f32.xlu0 %v1602
    %v1604 = vpop.xlane.xlu0 %1603
    %v1605 = vrcp.pop %v1604
    %v1606 = vmul.f32 %v1597, %v1605
    %v1607 = vpack.c.bf16 %v1606, %v1606
    %v1608 = vld [vmem:[%s975] sm:$0xf]
    %v1610 = vsel %vm759, %v1607, 0
    %v1613 = vsel %vm816, %v1608, 0
    %1615 = vmatprep.subr.bf16.mxu0 0
    %1616 = vmatpush1.bf16.msra.mxu0 0
    %1617 = vmatprep.subr.bf16.mxu0 0
    %1618 = vmatpush1.bf16.msra.mxu0 0
    %1619 = vmatprep.subr.bf16.mxu0 0
    %1620 = vmatpush1.bf16.msra.mxu0 0
    %1621 = vmatprep.subr.bf16.mxu0 0
    %1622 = vmatpush1.bf16.msra.mxu0 0
    %1623 = vmatprep.subr.bf16.mxu0 0
    %1624 = vmatpush1.bf16.msra.mxu0 0
    %1625 = vmatprep.subr.bf16.mxu0 0
    %1626 = vmatpush1.bf16.msra.mxu0 0
    %1627 = vmatprep.subr.bf16.mxu0 0
    %1628 = vmatpush1.bf16.msra.mxu0 0
    %1629 = vmatprep.subr.bf16.mxu0 0
    %1630 = vmatpush1.bf16.msra.mxu0 %v1613
    %1631 = vmatprep.subr.bf16.mxu0 0
    %1632 = vmatpush2.bf16.msra.mxu0 0
    %1633 = vmatprep.subr.bf16.mxu0 0
    %1634 = vmatpush2.bf16.msra.mxu0 0
    %1635 = vmatprep.subr.bf16.mxu0 0
    %1636 = vmatpush2.bf16.msra.mxu0 0
    %1637 = vmatprep.subr.bf16.mxu0 0
    %1638 = vmatpush2.bf16.msra.mxu0 0
    %1639 = vmatprep.subr.bf16.mxu0 0
    %1640 = vmatpush2.bf16.msra.mxu0 0
    %1641 = vmatprep.subr.bf16.mxu0 0
    %1642 = vmatpush2.bf16.msra.mxu0 0
    %1643 = vmatprep.subr.bf16.mxu0 0
    %1644 = vmatpush2.bf16.msra.mxu0 0
    %1645 = vmatprep.subr.bf16.mxu0 0
    %1646 = vmatpush2.bf16.msra.mxu0 0
    %1647 = vmatprep.mubr.bf16.mxu0 0
    %1648 = vmatmul.mubr.bf16.gmra.mxu0 %v1610
    %v1649 = vpop.f32.mrf.mxu0
    %v1650 = vadd.f32 0.0, %v1649
    %v1651 = vpop.f32.mrf.mxu0
    %v1652 = vpop.f32.mrf.mxu0
    %v1653 = vpop.f32.mrf.mxu0
    %1654 = vdwg.mxu0
    %v1656 = vsel %vm759, %v1498, 0
    %v1659 = vsel %vm816, %v1499, 0
    %1661 = vmatprep.subr.bf16.mxu0 0
    %1662 = vmatpush1.bf16.msra.mxu0 0
    %1663 = vmatprep.subr.bf16.mxu0 0
    %1664 = vmatpush1.bf16.msra.mxu0 0
    %1665 = vmatprep.subr.bf16.mxu0 0
    %1666 = vmatpush1.bf16.msra.mxu0 0
    %1667 = vmatprep.subr.bf16.mxu0 0
    %1668 = vmatpush1.bf16.msra.mxu0 0
    %1669 = vmatprep.subr.bf16.mxu0 0
    %1670 = vmatpush1.bf16.msra.mxu0 0
    %1671 = vmatprep.subr.bf16.mxu0 0
    %1672 = vmatpush1.bf16.msra.mxu0 0
    %1673 = vmatprep.subr.bf16.mxu0 0
    %1674 = vmatpush1.bf16.msra.mxu0 0
    %1675 = vmatprep.subr.bf16.mxu0 0
    %1676 = vmatpush1.bf16.msra.mxu0 %v1659
    %1677 = vmatprep.subr.bf16.mxu0 0
    %1678 = vmatpush2.bf16.msra.mxu0 0
    %1679 = vmatprep.subr.bf16.mxu0 0
    %1680 = vmatpush2.bf16.msra.mxu0 0
    %1681 = vmatprep.subr.bf16.mxu0 0
    %1682 = vmatpush2.bf16.msra.mxu0 0
    %1683 = vmatprep.subr.bf16.mxu0 0
    %1684 = vmatpush2.bf16.msra.mxu0 0
    %1685 = vmatprep.subr.bf16.mxu0 0
    %1686 = vmatpush2.bf16.msra.mxu0 0
    %1687 = vmatprep.subr.bf16.mxu0 0
    %1688 = vmatpush2.bf16.msra.mxu0 0
    %1689 = vmatprep.subr.bf16.mxu0 0
    %1690 = vmatpush2.bf16.msra.mxu0 0
    %1691 = vmatprep.subr.bf16.mxu0 0
    %1692 = vmatpush2.bf16.msra.mxu0 0
    %1693 = vmatprep.mubr.bf16.mxu0 0
    %1694 = vmatmul.mubr.bf16.gmra.mxu0 %v1656
    %v1695 = vpop.f32.mrf.mxu0
    %v1696 = vadd.f32 %v1650, %v1695
    %v1697 = vpop.f32.mrf.mxu0
    %v1698 = vpop.f32.mrf.mxu0
    %v1699 = vpop.f32.mrf.mxu0
    %1700 = vdwg.mxu0
    %v1701 = vpack.c.bf16 %v463, %v463
    %v1702 = vpack.c.bf16 %v521, %v521
    %v1703 = vpack.c.bf16 %v579, %v579
    %v1705 = vsel %vm759, %v1701, 0
    %v1708 = vsel %vm759, %v1702, 0
    %1710 = vmatprep.subr.bf16.mxu0 0
    %1711 = vmatpush1.bf16.xpose.msra.mxu0 0
    %1712 = vmatprep.subr.bf16.mxu0 0
    %1713 = vmatpush1.bf16.xpose.msra.mxu0 0
    %1714 = vmatprep.subr.bf16.mxu0 0
    %1715 = vmatpush1.bf16.xpose.msra.mxu0 0
    %1716 = vmatprep.subr.bf16.mxu0 0
    %1717 = vmatpush1.bf16.xpose.msra.mxu0 0
    %1718 = vmatprep.subr.bf16.mxu0 0
    %1719 = vmatpush1.bf16.xpose.msra.mxu0 0
    %1720 = vmatprep.subr.bf16.mxu0 0
    %1721 = vmatpush1.bf16.xpose.msra.mxu0 0
    %1722 = vmatprep.subr.bf16.mxu0 0
    %1723 = vmatpush1.bf16.xpose.msra.mxu0 0
    %1724 = vmatprep.subr.bf16.mxu0 0
    %1725 = vmatpush1.bf16.xpose.msra.mxu0 %v1708
    %1726 = vmatprep.subr.bf16.mxu0 0
    %1727 = vmatpush2.bf16.xpose.msra.mxu0 0
    %1728 = vmatprep.subr.bf16.mxu0 0
    %1729 = vmatpush2.bf16.xpose.msra.mxu0 0
    %1730 = vmatprep.subr.bf16.mxu0 0
    %1731 = vmatpush2.bf16.xpose.msra.mxu0 0
    %1732 = vmatprep.subr.bf16.mxu0 0
    %1733 = vmatpush2.bf16.xpose.msra.mxu0 0
    %1734 = vmatprep.subr.bf16.mxu0 0
    %1735 = vmatpush2.bf16.xpose.msra.mxu0 0
    %1736 = vmatprep.subr.bf16.mxu0 0
    %1737 = vmatpush2.bf16.xpose.msra.mxu0 0
    %1738 = vmatprep.subr.bf16.mxu0 0
    %1739 = vmatpush2.bf16.xpose.msra.mxu0 0
    %1740 = vmatprep.subr.bf16.mxu0 0
    %1741 = vmatpush2.bf16.xpose.msra.mxu0 0
    %1742 = vmatprep.mubr.bf16.mxu0 0
    %1743 = vmatmul.mubr.bf16.gmra.mxu0 %v1705
    %v1744 = vpop.f32.mrf.mxu0
    %v1745 = vadd.f32 0.0, %v1744
    %v1746 = vpop.f32.mrf.mxu0
    %v1747 = vpop.f32.mrf.mxu0
    %v1748 = vpop.f32.mrf.mxu0
    %1749 = vdwg.mxu0
    %v1750 = vsel %vm759, %v1745, -inf
    %1751 = vmax.xlane.f32.xlu0 %v1750
    %v1752 = vpop.xlane.xlu0 %1751
    %v1753 = vsub.f32 %v1745, %v1752
    %v1754 = vmul.f32 %v1753, 1.442695
    %v1755 = vpow.pop %v1754
    %v1756 = vpack.c.bf16 %v1755, %v1755
    %v1758 = vsel %vm759, %v1756, 0
    %v1761 = vsel %vm816, %v1703, 0
    %1763 = vmatprep.subr.bf16.mxu0 0
    %1764 = vmatpush1.bf16.msra.mxu0 0
    %1765 = vmatprep.subr.bf16.mxu0 0
    %1766 = vmatpush1.bf16.msra.mxu0 0
    %1767 = vmatprep.subr.bf16.mxu0 0
    %1768 = vmatpush1.bf16.msra.mxu0 0
    %1769 = vmatprep.subr.bf16.mxu0 0
    %1770 = vmatpush1.bf16.msra.mxu0 0
    %1771 = vmatprep.subr.bf16.mxu0 0
    %1772 = vmatpush1.bf16.msra.mxu0 0
    %1773 = vmatprep.subr.bf16.mxu0 0
    %1774 = vmatpush1.bf16.msra.mxu0 0
    %1775 = vmatprep.subr.bf16.mxu0 0
    %1776 = vmatpush1.bf16.msra.mxu0 0
    %1777 = vmatprep.subr.bf16.mxu0 0
    %1778 = vmatpush1.bf16.msra.mxu0 %v1761
    %1779 = vmatprep.subr.bf16.mxu0 0
    %1780 = vmatpush2.bf16.msra.mxu0 0
    %1781 = vmatprep.subr.bf16.mxu0 0
    %1782 = vmatpush2.bf16.msra.mxu0 0
    %1783 = vmatprep.subr.bf16.mxu0 0
    %1784 = vmatpush2.bf16.msra.mxu0 0
    %1785 = vmatprep.subr.bf16.mxu0 0
    %1786 = vmatpush2.bf16.msra.mxu0 0
    %1787 = vmatprep.subr.bf16.mxu0 0
    %1788 = vmatpush2.bf16.msra.mxu0 0
    %1789 = vmatprep.subr.bf16.mxu0 0
    %1790 = vmatpush2.bf16.msra.mxu0 0
    %1791 = vmatprep.subr.bf16.mxu0 0
    %1792 = vmatpush2.bf16.msra.mxu0 0
    %1793 = vmatprep.subr.bf16.mxu0 0
    %1794 = vmatpush2.bf16.msra.mxu0 0
    %1795 = vmatprep.mubr.bf16.mxu0 0
    %1796 = vmatmul.mubr.bf16.gmra.mxu0 %v1758
    %v1797 = vpop.f32.mrf.mxu0
    %v1798 = vadd.f32 0.0, %v1797
    %v1799 = vpop.f32.mrf.mxu0
    %v1800 = vpop.f32.mrf.mxu0
    %v1801 = vpop.f32.mrf.mxu0
    %1802 = vdwg.mxu0
    %v1803 = vsel %vm759, %v1755, 0.0
    %1804 = vadd.xlane.f32.xlu0 %v1803
    %v1805 = vpop.xlane.xlu0 %1804
    %v1806 = vrcp.pop %v1805
    %v1807 = vmul.f32 %v1798, %v1806
    %v1808 = vpack.c.bf16 %v1807, %v1807
    %v1809 = vld [vmem:[%s1177] sm:$0xf]
    %v1811 = vsel %vm759, %v1808, 0
    %v1814 = vsel %vm816, %v1809, 0
    %1816 = vmatprep.subr.bf16.mxu0 0
    %1817 = vmatpush1.bf16.msra.mxu0 0
    %1818 = vmatprep.subr.bf16.mxu0 0
    %1819 = vmatpush1.bf16.msra.mxu0 0
    %1820 = vmatprep.subr.bf16.mxu0 0
    %1821 = vmatpush1.bf16.msra.mxu0 0
    %1822 = vmatprep.subr.bf16.mxu0 0
    %1823 = vmatpush1.bf16.msra.mxu0 0
    %1824 = vmatprep.subr.bf16.mxu0 0
    %1825 = vmatpush1.bf16.msra.mxu0 0
    %1826 = vmatprep.subr.bf16.mxu0 0
    %1827 = vmatpush1.bf16.msra.mxu0 0
    %1828 = vmatprep.subr.bf16.mxu0 0
    %1829 = vmatpush1.bf16.msra.mxu0 0
    %1830 = vmatprep.subr.bf16.mxu0 0
    %1831 = vmatpush1.bf16.msra.mxu0 %v1814
    %1832 = vmatprep.subr.bf16.mxu0 0
    %1833 = vmatpush2.bf16.msra.mxu0 0
    %1834 = vmatprep.subr.bf16.mxu0 0
    %1835 = vmatpush2.bf16.msra.mxu0 0
    %1836 = vmatprep.subr.bf16.mxu0 0
    %1837 = vmatpush2.bf16.msra.mxu0 0
    %1838 = vmatprep.subr.bf16.mxu0 0
    %1839 = vmatpush2.bf16.msra.mxu0 0
    %1840 = vmatprep.subr.bf16.mxu0 0
    %1841 = vmatpush2.bf16.msra.mxu0 0
    %1842 = vmatprep.subr.bf16.mxu0 0
    %1843 = vmatpush2.bf16.msra.mxu0 0
    %1844 = vmatprep.subr.bf16.mxu0 0
    %1845 = vmatpush2.bf16.msra.mxu0 0
    %1846 = vmatprep.subr.bf16.mxu0 0
    %1847 = vmatpush2.bf16.msra.mxu0 0
    %1848 = vmatprep.mubr.bf16.mxu0 0
    %1849 = vmatmul.mubr.bf16.gmra.mxu0 %v1811
    %v1850 = vpop.f32.mrf.mxu0
    %v1851 = vadd.f32 0.0, %v1850
    %v1852 = vpop.f32.mrf.mxu0
    %v1853 = vpop.f32.mrf.mxu0
    %v1854 = vpop.f32.mrf.mxu0
    %1855 = vdwg.mxu0
    %v1856 = vadd.f32 %v1696, %v1851
    %v1857 = vpack.c.bf16 %v637, %v637
    %v1858 = vpack.c.bf16 %v695, %v695
    %v1859 = vpack.c.bf16 %v753, %v753
    %v1861 = vsel %vm759, %v1857, 0
    %v1864 = vsel %vm759, %v1858, 0
    %1866 = vmatprep.subr.bf16.mxu0 0
    %1867 = vmatpush1.bf16.xpose.msra.mxu0 0
    %1868 = vmatprep.subr.bf16.mxu0 0
    %1869 = vmatpush1.bf16.xpose.msra.mxu0 0
    %1870 = vmatprep.subr.bf16.mxu0 0
    %1871 = vmatpush1.bf16.xpose.msra.mxu0 0
    %1872 = vmatprep.subr.bf16.mxu0 0
    %1873 = vmatpush1.bf16.xpose.msra.mxu0 0
    %1874 = vmatprep.subr.bf16.mxu0 0
    %1875 = vmatpush1.bf16.xpose.msra.mxu0 0
    %1876 = vmatprep.subr.bf16.mxu0 0
    %1877 = vmatpush1.bf16.xpose.msra.mxu0 0
    %1878 = vmatprep.subr.bf16.mxu0 0
    %1879 = vmatpush1.bf16.xpose.msra.mxu0 0
    %1880 = vmatprep.subr.bf16.mxu0 0
    %1881 = vmatpush1.bf16.xpose.msra.mxu0 %v1864
    %1882 = vmatprep.subr.bf16.mxu0 0
    %1883 = vmatpush2.bf16.xpose.msra.mxu0 0
    %1884 = vmatprep.subr.bf16.mxu0 0
    %1885 = vmatpush2.bf16.xpose.msra.mxu0 0
    %1886 = vmatprep.subr.bf16.mxu0 0
    %1887 = vmatpush2.bf16.xpose.msra.mxu0 0
    %1888 = vmatprep.subr.bf16.mxu0 0
    %1889 = vmatpush2.bf16.xpose.msra.mxu0 0
    %1890 = vmatprep.subr.bf16.mxu0 0
    %1891 = vmatpush2.bf16.xpose.msra.mxu0 0
    %1892 = vmatprep.subr.bf16.mxu0 0
    %1893 = vmatpush2.bf16.xpose.msra.mxu0 0
    %1894 = vmatprep.subr.bf16.mxu0 0
    %1895 = vmatpush2.bf16.xpose.msra.mxu0 0
    %1896 = vmatprep.subr.bf16.mxu0 0
    %1897 = vmatpush2.bf16.xpose.msra.mxu0 0
    %1898 = vmatprep.mubr.bf16.mxu0 0
    %1899 = vmatmul.mubr.bf16.gmra.mxu0 %v1861
    %v1900 = vpop.f32.mrf.mxu0
    %v1901 = vadd.f32 0.0, %v1900
    %v1902 = vpop.f32.mrf.mxu0
    %v1903 = vpop.f32.mrf.mxu0
    %v1904 = vpop.f32.mrf.mxu0
    %1905 = vdwg.mxu0
    %v1906 = vsel %vm759, %v1901, -inf
    %1907 = vmax.xlane.f32.xlu0 %v1906
    %v1908 = vpop.xlane.xlu0 %1907
    %v1909 = vsub.f32 %v1901, %v1908
    %v1910 = vmul.f32 %v1909, 1.442695
    %v1911 = vpow.pop %v1910
    %v1912 = vpack.c.bf16 %v1911, %v1911
    %v1914 = vsel %vm759, %v1912, 0
    %v1917 = vsel %vm816, %v1859, 0
    %1919 = vmatprep.subr.bf16.mxu0 0
    %1920 = vmatpush1.bf16.msra.mxu0 0
    %1921 = vmatprep.subr.bf16.mxu0 0
    %1922 = vmatpush1.bf16.msra.mxu0 0
    %1923 = vmatprep.subr.bf16.mxu0 0
    %1924 = vmatpush1.bf16.msra.mxu0 0
    %1925 = vmatprep.subr.bf16.mxu0 0
    %1926 = vmatpush1.bf16.msra.mxu0 0
    %1927 = vmatprep.subr.bf16.mxu0 0
    %1928 = vmatpush1.bf16.msra.mxu0 0
    %1929 = vmatprep.subr.bf16.mxu0 0
    %1930 = vmatpush1.bf16.msra.mxu0 0
    %1931 = vmatprep.subr.bf16.mxu0 0
    %1932 = vmatpush1.bf16.msra.mxu0 0
    %1933 = vmatprep.subr.bf16.mxu0 0
    %1934 = vmatpush1.bf16.msra.mxu0 %v1917
    %1935 = vmatprep.subr.bf16.mxu0 0
    %1936 = vmatpush2.bf16.msra.mxu0 0
    %1937 = vmatprep.subr.bf16.mxu0 0
    %1938 = vmatpush2.bf16.msra.mxu0 0
    %1939 = vmatprep.subr.bf16.mxu0 0
    %1940 = vmatpush2.bf16.msra.mxu0 0
    %1941 = vmatprep.subr.bf16.mxu0 0
    %1942 = vmatpush2.bf16.msra.mxu0 0
    %1943 = vmatprep.subr.bf16.mxu0 0
    %1944 = vmatpush2.bf16.msra.mxu0 0
    %1945 = vmatprep.subr.bf16.mxu0 0
    %1946 = vmatpush2.bf16.msra.mxu0 0
    %1947 = vmatprep.subr.bf16.mxu0 0
    %1948 = vmatpush2.bf16.msra.mxu0 0
    %1949 = vmatprep.subr.bf16.mxu0 0
    %1950 = vmatpush2.bf16.msra.mxu0 0
    %1951 = vmatprep.mubr.bf16.mxu0 0
    %1952 = vmatmul.mubr.bf16.gmra.mxu0 %v1914
    %v1953 = vpop.f32.mrf.mxu0
    %v1954 = vadd.f32 0.0, %v1953
    %v1955 = vpop.f32.mrf.mxu0
    %v1956 = vpop.f32.mrf.mxu0
    %v1957 = vpop.f32.mrf.mxu0
    %1958 = vdwg.mxu0
    %v1959 = vsel %vm759, %v1911, 0.0
    %1960 = vadd.xlane.f32.xlu0 %v1959
    %v1961 = vpop.xlane.xlu0 %1960
    %v1962 = vrcp.pop %v1961
    %v1963 = vmul.f32 %v1954, %v1962
    %v1964 = vpack.c.bf16 %v1963, %v1963
    %v1965 = vld [vmem:[%s1334] sm:$0xf]
    %v1967 = vsel %vm759, %v1964, 0
    %v1970 = vsel %vm816, %v1965, 0
    %1972 = vmatprep.subr.bf16.mxu0 0
    %1973 = vmatpush1.bf16.msra.mxu0 0
    %1974 = vmatprep.subr.bf16.mxu0 0
    %1975 = vmatpush1.bf16.msra.mxu0 0
    %1976 = vmatprep.subr.bf16.mxu0 0
    %1977 = vmatpush1.bf16.msra.mxu0 0
    %1978 = vmatprep.subr.bf16.mxu0 0
    %1979 = vmatpush1.bf16.msra.mxu0 0
    %1980 = vmatprep.subr.bf16.mxu0 0
    %1981 = vmatpush1.bf16.msra.mxu0 0
    %1982 = vmatprep.subr.bf16.mxu0 0
    %1983 = vmatpush1.bf16.msra.mxu0 0
    %1984 = vmatprep.subr.bf16.mxu0 0
    %1985 = vmatpush1.bf16.msra.mxu0 0
    %1986 = vmatprep.subr.bf16.mxu0 0
    %1987 = vmatpush1.bf16.msra.mxu0 %v1970
    %1988 = vmatprep.subr.bf16.mxu0 0
    %1989 = vmatpush2.bf16.msra.mxu0 0
    %1990 = vmatprep.subr.bf16.mxu0 0
    %1991 = vmatpush2.bf16.msra.mxu0 0
    %1992 = vmatprep.subr.bf16.mxu0 0
    %1993 = vmatpush2.bf16.msra.mxu0 0
    %1994 = vmatprep.subr.bf16.mxu0 0
    %1995 = vmatpush2.bf16.msra.mxu0 0
    %1996 = vmatprep.subr.bf16.mxu0 0
    %1997 = vmatpush2.bf16.msra.mxu0 0
    %1998 = vmatprep.subr.bf16.mxu0 0
    %1999 = vmatpush2.bf16.msra.mxu0 0
    %2000 = vmatprep.subr.bf16.mxu0 0
    %2001 = vmatpush2.bf16.msra.mxu0 0
    %2002 = vmatprep.subr.bf16.mxu0 0
    %2003 = vmatpush2.bf16.msra.mxu0 0
    %2004 = vmatprep.mubr.bf16.mxu0 0
    %2005 = vmatmul.mubr.bf16.gmra.mxu0 %v1967
    %v2006 = vpop.f32.mrf.mxu0
    %v2007 = vadd.f32 0.0, %v2006
    %v2008 = vpop.f32.mrf.mxu0
    %v2009 = vpop.f32.mrf.mxu0
    %v2010 = vpop.f32.mrf.mxu0
    %2011 = vdwg.mxu0
    %v2012 = vadd.f32 %v1856, %v2007
    %v2013 = vadd.f32 %v2012, %v1387
    %2014 = vst.msk [vmem:[#allocation2 + $0x8] sm:$0xff] %vm59, %v2013
    // Predicated region
    $region34: #{tpu_custom_call.1} parent=1 // pred_check
      _
    $region35: #{tpu_custom_call.1} parent=1 // pred_check_branch
      %2016 = sbr.rel (0) target = $region37
    $region36: #{tpu_custom_call.1} parent=1 // pred_region
      %s2018 = ssub.s32 256, 256
      %2019 = vsyncadd [#allocation3], %s2018
      %s2020 = sshll.u32 [#allocation2], 4
      %s2021 = int_to_ptr.vmem [resolvable:$true] %s2020
      %2026 = dma.vmem_to_hbm [thread:$0]  %s2021, 256, %s8, [#allocation3], 128, 128, 8
    $region37: #{tpu_custom_call.1} parent=1 // pred_fallthru
      _
    // Predicated region
    $region38: #{tpu_custom_call.1} parent=1 // pred_check
      _
    $region39: #{tpu_custom_call.1} parent=1 // pred_check_branch
      %2028 = sbr.rel (0) target = $region41
    $region40: #{tpu_custom_call.1} parent=1 // pred_region
      %2029 = dma.done [#allocation3], 256
    $region41: #{tpu_custom_call.1} parent=1 // pred_fallthru
      _
    %2030 = vsyncpa [#allocation3], 1

</llo_original>
